<compile_context>
chip_gen: v7x
topology: tpu7x:2x2x1
jax: 0.10.0
libtpu: 0.0.40
codegen_flags: <defaults>
</compile_context>

<pallas_src>
import jax
import jax.numpy as jnp
from jax import lax
from jax.experimental import pallas as pl
from jax.experimental.pallas import tpu as pltpu


# -----------------------------------------------------------------------------
# Kernel
# -----------------------------------------------------------------------------
def cnn_lstm_attn_kernel(
    x_ref,      # (T, Bt, 3F)  bf16   im2col'd time-major input tile
    wconv_ref,  # (3F, C)      bf16   fused conv taps
    bconv_ref,  # (1, C)       f32
    wih_ref,    # (C, 4H)      bf16   eval-BN folded in
    whh_ref,    # (H, 4H)      bf16
    bl_ref,     # (1, 4H)      f32    b_ih + b_hh + BN shift @ W_ih^T
    wa1_ref,    # (H, H//2)    bf16
    ba1_ref,    # (1, H//2)    f32
    wa2_ref,    # (1, H//2)    f32    row vector (attention out_features=1)
    wf1_ref,    # (H, 64)      bf16
    bf1_ref,    # (1, 64)      f32
    wf2_ref,    # (1, 64)      bf16   row vector (head out_features=1)
    bf2_ref,    # (1, 1)       f32
    out_ref,    # (1, 1, Bt)   f32    lane-dense output row
    gates_ref,  # (T, Bt, 4H)  f32    VMEM scratch: hoisted input projection
    lstm_ref,   # (T, Bt, H)   bf16   VMEM scratch: per-step hidden states
):
    T, Bt, _ = x_ref.shape
    H = whh_ref.shape[0]

    # ---- Conv1d(k=3, pad=1) as one fused matmul + ReLU -----------------------
    xc = x_ref[...].reshape(T * Bt, -1)                               # bf16
    conv = jnp.dot(xc, wconv_ref[...], preferred_element_type=jnp.float32)
    feat = jnp.maximum(conv + bconv_ref[...], 0.0)                    # (T*Bt, C)
    # eval BatchNorm folded into W_ih/bias in the wrapper; Dropout = identity.

    # ---- LSTM input projection hoisted out of the serial recurrence ----------
    # Staged through VMEM scratch so no (T*Bt, 4H) f32 value stays live across
    # the unrolled recurrence (bounds vreg live ranges; avoids spills at big T).
    gates_ref[...] = (
        jnp.dot(feat.astype(jnp.bfloat16), wih_ref[...],
                preferred_element_type=jnp.float32)
        + bl_ref[...]
    ).reshape(T, Bt, 4 * H)

    whh = whh_ref[...]                                                # (H, 4H)

    def step(t, carry):
        h, c = carry
        g = gates_ref[t] + jnp.dot(h.astype(jnp.bfloat16), whh,
                                   preferred_element_type=jnp.float32)
        i_g = jax.nn.sigmoid(g[:, 0 * H:1 * H])
        f_g = jax.nn.sigmoid(g[:, 1 * H:2 * H])
        g_g = jnp.tanh(g[:, 2 * H:3 * H])
        o_g = jax.nn.sigmoid(g[:, 3 * H:4 * H])
        c_n = f_g * c + i_g * g_g
        h_n = o_g * jnp.tanh(c_n)
        lstm_ref[t] = h_n.astype(jnp.bfloat16)                        # bf16 scratch
        return (h_n, c_n)

    h0 = jnp.zeros((Bt, H), jnp.float32)
    c0 = jnp.zeros((Bt, H), jnp.float32)
    # Small static T -> full unroll (scheduler interleaves MXU/EUP/VPU work);
    # large T -> bounded unroll to avoid code-size / register-pressure blowup.
    unroll = True if T <= 16 else 8
    lax.fori_loop(0, T, step, (h0, c0), unroll=unroll)

    lstm_all = lstm_ref[...]                                          # (T,Bt,H) bf16
    hflat = lstm_all.reshape(T * Bt, H)

    # ---- SimplifiedTemporalAttention ------------------------------------------
    a1 = jnp.tanh(
        jnp.dot(hflat, wa1_ref[...], preferred_element_type=jnp.float32)
        + ba1_ref[...]
    )                                                                 # (T*Bt, H/2)
    # Second attention Linear has out_features=1: VPU multiply + lane reduce.
    # Its scalar bias shifts every score equally -> softmax-invariant -> dropped.
    scores = jnp.sum(a1 * wa2_ref[...], axis=-1, keepdims=True)       # (T*Bt, 1)
    scores = scores.reshape(T, Bt, 1)
    # Softmax over time (PyTorch dim=1 of (B,T,1)); column layout matches the
    # lane-broadcast needed by the weighted sum below.
    m = jnp.max(scores, axis=0, keepdims=True)
    e = jnp.exp(scores - m)
    denom = jnp.sum(e, axis=0, keepdims=True)
    w = e * pl.reciprocal(denom, approx=True)                         # (T, Bt, 1)
    # Dropout on attention weights: identity (eval).
    attended = jnp.sum(w * lstm_all, axis=0)                          # (Bt, H) f32

    # ---- Final MLP head --------------------------------------------------------
    f1 = jnp.maximum(
        jnp.dot(attended.astype(jnp.bfloat16), wf1_ref[...],
                preferred_element_type=jnp.float32)
        + bf1_ref[...],
        0.0,
    )                                                                 # (Bt, 64)
    # Final Linear (out_features=1) computed as (1,64) @ (Bt,64)^T so the result
    # is already a lane-dense (1, Bt) row -> unmasked stores to the output.
    out_row = lax.dot_general(
        wf2_ref[...], f1.astype(jnp.bfloat16),
        dimension_numbers=(((1,), (1,)), ((), ())),
        preferred_element_type=jnp.float32,
    ) + bf2_ref[...]                                                  # (1, Bt)
    out_ref[0] = out_row.astype(out_ref.dtype)


# -----------------------------------------------------------------------------
# Parameters (PyTorch layout, matching the module's _init_weights)
# -----------------------------------------------------------------------------
def init_params(key, num_features, cnn_filters, lstm_units):
    F_, C, H = num_features, cnn_filters, lstm_units
    ks = jax.random.split(key, 8)

    def xavier_uniform(k, shape):  # torch (out_features, in_features) layout
        fan_out, fan_in = shape
        bound = (6.0 / (fan_in + fan_out)) ** 0.5
        return jax.random.uniform(k, shape, jnp.float32, -bound, bound)

    # Conv1d: kaiming_normal_, fan_in = F*3
    conv_w = jax.random.normal(ks[0], (C, F_, 3), jnp.float32) * (2.0 / (F_ * 3)) ** 0.5

    return dict(
        conv_w=conv_w,
        conv_b=jnp.zeros((C,), jnp.float32),
        bn_gamma=jnp.ones((C,), jnp.float32),
        bn_beta=jnp.zeros((C,), jnp.float32),
        bn_mean=jnp.zeros((C,), jnp.float32),
        bn_var=jnp.ones((C,), jnp.float32),
        w_ih=xavier_uniform(ks[1], (4 * H, C)),
        w_hh=xavier_uniform(ks[2], (4 * H, H)),
        b_ih=jnp.zeros((4 * H,), jnp.float32),
        b_hh=jnp.zeros((4 * H,), jnp.float32),
        attn_w1=xavier_uniform(ks[3], (H // 2, H)),
        attn_b1=jnp.zeros((H // 2,), jnp.float32),
        attn_w2=xavier_uniform(ks[4], (1, H // 2)),
        attn_b2=jnp.zeros((1,), jnp.float32),     # softmax-invariant; unused
        fc_w1=xavier_uniform(ks[5], (64, H)),
        fc_b1=jnp.zeros((64,), jnp.float32),
        fc_w2=xavier_uniform(ks[6], (1, 64)),
        fc_b2=jnp.zeros((1,), jnp.float32),
    )


# -----------------------------------------------------------------------------
# Tile sizing: VMEM-budget aware (counts (8,128) padding + double buffering)
# -----------------------------------------------------------------------------
_VMEM_BUDGET_BYTES = 40 * 2**20   # fits v7x's 64 MiB/TC with headroom; well
                                  # under v5e/v6e's 128 MiB physical VMEM


def _round_up(x, m):
    return (x + m - 1) // m * m


def _vmem_bytes_estimate(bt, T, F_, C, H):
    """Conservative per-grid-step VMEM estimate incl. (8,128) tile padding and
    double-buffered pipelined blocks (the narrow 3F-lane x block pads to 128)."""
    lane = lambda n: _round_up(max(n, 1), 128)
    sub = lambda n: _round_up(max(n, 1), 8)
    bt_p = sub(bt)
    x_blk = 2 * (T * bt_p * lane(3 * F_) * 2)              # bf16 input, x2 buffers
    gates = T * bt_p * lane(4 * H) * 4                     # f32 scratch
    lstm = T * bt_p * lane(H) * 2                          # bf16 scratch
    weights = 2 * 2 * (sub(3 * F_) * lane(C) + sub(C) * lane(4 * H)
                       + sub(H) * lane(4 * H) + sub(H) * lane(H // 2)
                       + sub(H) * lane(64) + 8 * lane(64))  # bf16, x2 buffers
    biases = 2 * 4 * 8 * (lane(C) + lane(4 * H) + lane(H // 2) + lane(64) + 2 * 128)
    live = bt_p * lane(4 * H) * 4 * 6                      # recurrence working set
    out_blk = 2 * 8 * lane(bt) * 4
    return x_blk + gates + lstm + weights + biases + live + out_blk


def _pick_batch_tile(B, T, F_, C, H, budget):
    """Batch tile: multiple of 8, >= 2 grid steps whenever B >= 16 (so v7x's two
    TensorCores both get work on the parallel batch axis), shrunk to fit the
    VMEM budget.  Tiny batches use a single full-extent tile."""
    if B < 16:
        return B
    bt = min(256, _round_up(pl.cdiv(B, 2), 8))   # prefer MXU-filling M (v6e/v7x)
    while bt > 8 and _vmem_bytes_estimate(bt, T, F_, C, H) > budget:
        bt = _round_up(bt // 2, 8)
    return bt


# -----------------------------------------------------------------------------
# Wrapper: parameter folding + pallas_call
# -----------------------------------------------------------------------------
@jax.jit
def improved_cnn_lstm_attention(x_btf, params):
    """x_btf: (B, T, num_features) float32 — mirrors the PyTorch module input."""
    B, T, F_ = x_btf.shape
    C = params["conv_w"].shape[0]
    H = params["w_hh"].shape[1]
    H2 = H // 2

    # ---- layout plumbing: time-major + im2col for the k=3/pad=1 conv --------
    # TODO(synk): for large F drop the im2col tripling and do 3 shifted in-kernel
    #             matmuls instead (cuts x HBM traffic ~3x); at small F it's noise.
    x_tm = jnp.transpose(x_btf, (1, 0, 2)).astype(jnp.float32)        # (T, B, F)
    xpad = jnp.pad(x_tm, ((1, 1), (0, 0), (0, 0)))                    # (T+2, B, F)
    x_im2col = jnp.concatenate([xpad[:-2], xpad[1:-1], xpad[2:]], axis=-1)
    x_im2col = x_im2col.astype(jnp.bfloat16)                          # (T, B, 3F)

    # ---- fold parameters into kernel layout ----------------------------------
    # Fused conv weight (3F, C): tap-major rows match the im2col column order.
    wconv = jnp.transpose(params["conv_w"], (2, 1, 0)).reshape(3 * F_, C)
    bconv = params["conv_b"].reshape(1, C)

    # eval BatchNorm follows the ReLU -> per-channel affine z*s + t, folded
    # exactly into the LSTM input projection.
    s = params["bn_gamma"] * lax.rsqrt(params["bn_var"] + 1e-5)
    t = params["bn_beta"] - params["bn_mean"] * s
    wih_t = params["w_ih"].T                                          # (C, 4H)
    wih = wih_t * s[:, None]
    bl = (params["b_ih"] + params["b_hh"] + t @ wih_t).reshape(1, 4 * H)
    whh = params["w_hh"].T                                            # (H, 4H)

    wa1 = params["attn_w1"].T                                         # (H, H//2)
    ba1 = params["attn_b1"].reshape(1, H2)
    wa2 = params["attn_w2"].reshape(1, H2)     # attn_b2 dropped (softmax-inv.)
    wf1 = params["fc_w1"].T                                           # (H, 64)
    bf1 = params["fc_b1"].reshape(1, 64)
    wf2 = params["fc_w2"].reshape(1, 64)
    bf2 = params["fc_b2"].reshape(1, 1)

    bf16 = jnp.bfloat16
    weights = (
        wconv.astype(bf16), bconv,
        wih.astype(bf16), whh.astype(bf16), bl,
        wa1.astype(bf16), ba1, wa2,
        wf1.astype(bf16), bf1, wf2.astype(bf16), bf2,
    )

    # ---- tile / grid sizing ----------------------------------------------------
    bt = _pick_batch_tile(B, T, F_, C, H, _VMEM_BUDGET_BYTES)
    b_pad = _round_up(B, bt)
    if b_pad != B:
        x_im2col = jnp.pad(x_im2col, ((0, 0), (0, b_pad - B), (0, 0)))
    grid_b = b_pad // bt

    est = _vmem_bytes_estimate(bt, T, F_, C, H)
    # >= 32 MiB so v5e's 16 MiB scoped default never caps the pipeline;
    # <= 48 MiB so it always fits v7x's 64 MiB/TC physical VMEM.
    vmem_limit = int(min(48 * 2**20, max(32 * 2**20, est * 5 // 4)))

    x_spec = pl.BlockSpec((T, bt, 3 * F_), lambda b: (0, b, 0))
    # Constant index_maps: Mosaic's pipeline skips the re-DMA for unchanged
    # block indices, so weights are fetched once despite the batch grid.
    w_specs = [pl.BlockSpec(w.shape, lambda b: (0, 0)) for w in weights]
    # Lane-dense output: each grid step owns one (1, 1, bt) row (batch on lanes).
    out_spec = pl.BlockSpec((1, 1, bt), lambda b: (b, 0, 0))

    out3 = pl.pallas_call(
        cnn_lstm_attn_kernel,
        out_shape=jax.ShapeDtypeStruct((grid_b, 1, bt), jnp.float32),
        grid=(grid_b,),
        in_specs=[x_spec] + w_specs,
        out_specs=out_spec,
        scratch_shapes=[
            pltpu.VMEM((T, bt, 4 * H), jnp.float32),   # hoisted gate projections
            pltpu.VMEM((T, bt, H), jnp.bfloat16),      # LSTM hidden states
        ],
        compiler_params=pltpu.CompilerParams(
            dimension_semantics=("parallel",),
            vmem_limit_bytes=vmem_limit),
    )(x_im2col, *weights)

    # (grid_b, 1, bt) lane-dense rows -> (B, 1) like the PyTorch module.
    return out3.reshape(grid_b * bt)[:B].reshape(B, 1)


if __name__ == "__main__":
    B, T = 2, 8                 # batch, sequence length
    num_features = 4
    cnn_filters = 16
    lstm_units = 32

    key = jax.random.PRNGKey(0)
    k_x, k_p = jax.random.split(key)
    x = jax.random.normal(k_x, (B, T, num_features), jnp.float32)
    params = init_params(k_p, num_features, cnn_filters, lstm_units)

    out = improved_cnn_lstm_attention(x, params)
    out = jax.block_until_ready(out)
    assert out.shape == (B, 1) and out.dtype == jnp.float32
    assert bool(jnp.all(jnp.isfinite(out)))
    print("KERNEL_OK")
</pallas_src>

<mosaic_0001>
module attributes {stable_mosaic.version = 11 : i64} {
  func.func @cnn_lstm_attn_kernel(%arg0: i32, %arg1: memref<8x2x12xbf16, #tpu.memory_space<vmem>>, %arg2: memref<12x16xbf16, #tpu.memory_space<vmem>>, %arg3: memref<1x16xf32, #tpu.memory_space<vmem>>, %arg4: memref<16x128xbf16, #tpu.memory_space<vmem>>, %arg5: memref<32x128xbf16, #tpu.memory_space<vmem>>, %arg6: memref<1x128xf32, #tpu.memory_space<vmem>>, %arg7: memref<32x16xbf16, #tpu.memory_space<vmem>>, %arg8: memref<1x16xf32, #tpu.memory_space<vmem>>, %arg9: memref<1x16xf32, #tpu.memory_space<vmem>>, %arg10: memref<32x64xbf16, #tpu.memory_space<vmem>>, %arg11: memref<1x64xf32, #tpu.memory_space<vmem>>, %arg12: memref<1x64xbf16, #tpu.memory_space<vmem>>, %arg13: memref<1x1xf32, #tpu.memory_space<vmem>>, %arg14: memref<1x1x2xf32, #tpu.memory_space<vmem>>, %arg15: memref<8x2x128xf32, #tpu.memory_space<vmem>>, %arg16: memref<8x2x32xbf16, #tpu.memory_space<vmem>>) attributes {dimension_semantics = [#tpu.dimension_semantics<parallel>], iteration_bounds = array<i64: 1>, scalar_prefetch = 0 : i64, scratch_operands = 2 : i64, tpu.core_type = #tpu.core_type<tc>, window_params = [{transform_indices = @transform_0, window_bounds = array<i64: 8, 2, 12>}, {pipeline_mode = #tpu.pipeline_mode<synchronous>, transform_indices = @transform_1, window_bounds = array<i64: 12, 16>}, {pipeline_mode = #tpu.pipeline_mode<synchronous>, transform_indices = @transform_2, window_bounds = array<i64: 1, 16>}, {pipeline_mode = #tpu.pipeline_mode<synchronous>, transform_indices = @transform_3, window_bounds = array<i64: 16, 128>}, {pipeline_mode = #tpu.pipeline_mode<synchronous>, transform_indices = @transform_4, window_bounds = array<i64: 32, 128>}, {pipeline_mode = #tpu.pipeline_mode<synchronous>, transform_indices = @transform_5, window_bounds = array<i64: 1, 128>}, {pipeline_mode = #tpu.pipeline_mode<synchronous>, transform_indices = @transform_6, window_bounds = array<i64: 32, 16>}, {pipeline_mode = #tpu.pipeline_mode<synchronous>, transform_indices = @transform_7, window_bounds = array<i64: 1, 16>}, {pipeline_mode = #tpu.pipeline_mode<synchronous>, transform_indices = @transform_8, window_bounds = array<i64: 1, 16>}, {pipeline_mode = #tpu.pipeline_mode<synchronous>, transform_indices = @transform_9, window_bounds = array<i64: 32, 64>}, {pipeline_mode = #tpu.pipeline_mode<synchronous>, transform_indices = @transform_10, window_bounds = array<i64: 1, 64>}, {pipeline_mode = #tpu.pipeline_mode<synchronous>, transform_indices = @transform_11, window_bounds = array<i64: 1, 64>}, {pipeline_mode = #tpu.pipeline_mode<synchronous>, transform_indices = @transform_12, window_bounds = array<i64: 1, 1>}, {transform_indices = @transform_13, window_bounds = array<i64: 1, 1, 2>}]} {
    %c0 = arith.constant 0 : index
    %c0_0 = arith.constant 0 : index
    %c0_1 = arith.constant 0 : index
    %0 = vector.load %arg1[%c0, %c0_0, %c0_1] : memref<8x2x12xbf16, #tpu.memory_space<vmem>>, vector<8x2x12xbf16>
    %1 = vector.shape_cast %0 : vector<8x2x12xbf16> to vector<16x12xbf16>
    %c0_2 = arith.constant 0 : index
    %c0_3 = arith.constant 0 : index
    %2 = vector.load %arg2[%c0_2, %c0_3] : memref<12x16xbf16, #tpu.memory_space<vmem>>, vector<12x16xbf16>
    %cst = arith.constant dense<0.000000e+00> : vector<16x16xf32>
    %3 = tpu.matmul %1, %2, %cst {dimension_numbers = #tpu.dot_dimension_numbers<[1], [0], [0], [1], [0, 0, 1, 1], [], []>} : vector<16x12xbf16>, vector<12x16xbf16>, vector<16x16xf32> -> vector<16x16xf32>
    %c0_4 = arith.constant 0 : index
    %c0_5 = arith.constant 0 : index
    %4 = vector.load %arg3[%c0_4, %c0_5] : memref<1x16xf32, #tpu.memory_space<vmem>>, vector<1x16xf32>
    %5 = vector.broadcast %4 : vector<1x16xf32> to vector<16x16xf32>
    %6 = arith.addf %3, %5 : vector<16x16xf32>
    %cst_6 = arith.constant 0.000000e+00 : f32
    %7 = vector.broadcast %cst_6 : f32 to vector<16x16xf32>
    %8 = arith.maximumf %6, %7 : vector<16x16xf32>
    %9 = arith.truncf %8 : vector<16x16xf32> to vector<16x16xbf16>
    %c0_7 = arith.constant 0 : index
    %c0_8 = arith.constant 0 : index
    %10 = vector.load %arg4[%c0_7, %c0_8] : memref<16x128xbf16, #tpu.memory_space<vmem>>, vector<16x128xbf16>
    %cst_9 = arith.constant dense<0.000000e+00> : vector<16x128xf32>
    %11 = tpu.matmul %9, %10, %cst_9 {dimension_numbers = #tpu.dot_dimension_numbers<[1], [0], [0], [1], [0, 0, 1, 1], [], []>} : vector<16x16xbf16>, vector<16x128xbf16>, vector<16x128xf32> -> vector<16x128xf32>
    %c0_10 = arith.constant 0 : index
    %c0_11 = arith.constant 0 : index
    %12 = vector.load %arg6[%c0_10, %c0_11] : memref<1x128xf32, #tpu.memory_space<vmem>>, vector<1x128xf32>
    %13 = vector.broadcast %12 : vector<1x128xf32> to vector<16x128xf32>
    %14 = arith.addf %11, %13 : vector<16x128xf32>
    %15 = vector.shape_cast %14 : vector<16x128xf32> to vector<8x2x128xf32>
    %c0_12 = arith.constant 0 : index
    %c0_13 = arith.constant 0 : index
    %c0_14 = arith.constant 0 : index
    %16 = vector.load %arg15[%c0_12, %c0_13, %c0_14] : memref<8x2x128xf32, #tpu.memory_space<vmem>>, vector<8x2x128xf32>
    tpu.vector_store %arg15[%c0_12, %c0_13, %c0_14], %15 {strides = array<i32>} : memref<8x2x128xf32, #tpu.memory_space<vmem>>, vector<8x2x128xf32>,
    %c0_15 = arith.constant 0 : index
    %c0_16 = arith.constant 0 : index
    %17 = vector.load %arg5[%c0_15, %c0_16] : memref<32x128xbf16, #tpu.memory_space<vmem>>, vector<32x128xbf16>
    %cst_17 = arith.constant 0.000000e+00 : f32
    %18 = vector.broadcast %cst_17 : f32 to vector<2x32xf32>
    %cst_18 = arith.constant 0.000000e+00 : f32
    %19 = vector.broadcast %cst_18 : f32 to vector<2x32xf32>
    %c0_i32 = arith.constant 0 : i32
    %20 = arith.index_cast %c0_i32 : i32 to index
    %c0_19 = arith.constant 0 : index
    %c0_20 = arith.constant 0 : index
    %21 = vector.load %arg15[%20, %c0_19, %c0_20] : memref<8x2x128xf32, #tpu.memory_space<vmem>>, vector<1x2x128xf32>
    %22 = vector.shape_cast %21 : vector<1x2x128xf32> to vector<2x128xf32>
    %23 = arith.truncf %18 : vector<2x32xf32> to vector<2x32xbf16>
    %cst_21 = arith.constant dense<0.000000e+00> : vector<2x128xf32>
    %24 = tpu.matmul %23, %17, %cst_21 {dimension_numbers = #tpu.dot_dimension_numbers<[1], [0], [0], [1], [0, 0, 1, 1], [], []>} : vector<2x32xbf16>, vector<32x128xbf16>, vector<2x128xf32> -> vector<2x128xf32>
    %25 = arith.addf %22, %24 : vector<2x128xf32>
    %26 = vector.extract_strided_slice %25 {offsets = [0, 0], sizes = [2, 32], strides = [1, 1]} : vector<2x128xf32> to vector<2x32xf32>
    %27 = arith.negf %26 : vector<2x32xf32>
    %28 = math.exp %27 : vector<2x32xf32>
    %cst_22 = arith.constant 1.000000e+00 : f32
    %29 = vector.broadcast %cst_22 : f32 to vector<2x32xf32>
    %30 = arith.addf %29, %28 : vector<2x32xf32>
    %31 = arith.divf %29, %30 : vector<2x32xf32>
    %32 = vector.extract_strided_slice %25 {offsets = [0, 32], sizes = [2, 32], strides = [1, 1]} : vector<2x128xf32> to vector<2x32xf32>
    %33 = arith.negf %32 : vector<2x32xf32>
    %34 = math.exp %33 : vector<2x32xf32>
    %cst_23 = arith.constant 1.000000e+00 : f32
    %35 = vector.broadcast %cst_23 : f32 to vector<2x32xf32>
    %36 = arith.addf %35, %34 : vector<2x32xf32>
    %37 = arith.divf %35, %36 : vector<2x32xf32>
    %38 = vector.extract_strided_slice %25 {offsets = [0, 64], sizes = [2, 32], strides = [1, 1]} : vector<2x128xf32> to vector<2x32xf32>
    %39 = math.tanh %38 : vector<2x32xf32>
    %40 = vector.extract_strided_slice %25 {offsets = [0, 96], sizes = [2, 32], strides = [1, 1]} : vector<2x128xf32> to vector<2x32xf32>
    %41 = arith.negf %40 : vector<2x32xf32>
    %42 = math.exp %41 : vector<2x32xf32>
    %cst_24 = arith.constant 1.000000e+00 : f32
    %43 = vector.broadcast %cst_24 : f32 to vector<2x32xf32>
    %44 = arith.addf %43, %42 : vector<2x32xf32>
    %45 = arith.divf %43, %44 : vector<2x32xf32>
    %46 = arith.mulf %37, %19 : vector<2x32xf32>
    %47 = arith.mulf %31, %39 : vector<2x32xf32>
    %48 = arith.addf %46, %47 : vector<2x32xf32>
    %49 = math.tanh %48 : vector<2x32xf32>
    %50 = arith.mulf %45, %49 : vector<2x32xf32>
    %51 = arith.truncf %50 : vector<2x32xf32> to vector<2x32xbf16>
    %52 = arith.index_cast %c0_i32 : i32 to index
    %c0_25 = arith.constant 0 : index
    %c0_26 = arith.constant 0 : index
    %53 = vector.load %arg16[%52, %c0_25, %c0_26] : memref<8x2x32xbf16, #tpu.memory_space<vmem>>, vector<1x2x32xbf16>
    %54 = vector.shape_cast %53 : vector<1x2x32xbf16> to vector<2x32xbf16>
    %55 = vector.shape_cast %51 : vector<2x32xbf16> to vector<1x2x32xbf16>
    tpu.vector_store %arg16[%52, %c0_25, %c0_26], %55 {strides = array<i32>} : memref<8x2x32xbf16, #tpu.memory_space<vmem>>, vector<1x2x32xbf16>,
    %c1_i32 = arith.constant 1 : i32
    %56 = arith.index_cast %c1_i32 : i32 to index
    %c0_27 = arith.constant 0 : index
    %c0_28 = arith.constant 0 : index
    %57 = vector.load %arg15[%56, %c0_27, %c0_28] : memref<8x2x128xf32, #tpu.memory_space<vmem>>, vector<1x2x128xf32>
    %58 = vector.shape_cast %57 : vector<1x2x128xf32> to vector<2x128xf32>
    %59 = arith.truncf %50 : vector<2x32xf32> to vector<2x32xbf16>
    %cst_29 = arith.constant dense<0.000000e+00> : vector<2x128xf32>
    %60 = tpu.matmul %59, %17, %cst_29 {dimension_numbers = #tpu.dot_dimension_numbers<[1], [0], [0], [1], [0, 0, 1, 1], [], []>} : vector<2x32xbf16>, vector<32x128xbf16>, vector<2x128xf32> -> vector<2x128xf32>
    %61 = arith.addf %58, %60 : vector<2x128xf32>
    %62 = vector.extract_strided_slice %61 {offsets = [0, 0], sizes = [2, 32], strides = [1, 1]} : vector<2x128xf32> to vector<2x32xf32>
    %63 = arith.negf %62 : vector<2x32xf32>
    %64 = math.exp %63 : vector<2x32xf32>
    %cst_30 = arith.constant 1.000000e+00 : f32
    %65 = vector.broadcast %cst_30 : f32 to vector<2x32xf32>
    %66 = arith.addf %65, %64 : vector<2x32xf32>
    %67 = arith.divf %65, %66 : vector<2x32xf32>
    %68 = vector.extract_strided_slice %61 {offsets = [0, 32], sizes = [2, 32], strides = [1, 1]} : vector<2x128xf32> to vector<2x32xf32>
    %69 = arith.negf %68 : vector<2x32xf32>
    %70 = math.exp %69 : vector<2x32xf32>
    %cst_31 = arith.constant 1.000000e+00 : f32
    %71 = vector.broadcast %cst_31 : f32 to vector<2x32xf32>
    %72 = arith.addf %71, %70 : vector<2x32xf32>
    %73 = arith.divf %71, %72 : vector<2x32xf32>
    %74 = vector.extract_strided_slice %61 {offsets = [0, 64], sizes = [2, 32], strides = [1, 1]} : vector<2x128xf32> to vector<2x32xf32>
    %75 = math.tanh %74 : vector<2x32xf32>
    %76 = vector.extract_strided_slice %61 {offsets = [0, 96], sizes = [2, 32], strides = [1, 1]} : vector<2x128xf32> to vector<2x32xf32>
    %77 = arith.negf %76 : vector<2x32xf32>
    %78 = math.exp %77 : vector<2x32xf32>
    %cst_32 = arith.constant 1.000000e+00 : f32
    %79 = vector.broadcast %cst_32 : f32 to vector<2x32xf32>
    %80 = arith.addf %79, %78 : vector<2x32xf32>
    %81 = arith.divf %79, %80 : vector<2x32xf32>
    %82 = arith.mulf %73, %48 : vector<2x32xf32>
    %83 = arith.mulf %67, %75 : vector<2x32xf32>
    %84 = arith.addf %82, %83 : vector<2x32xf32>
    %85 = math.tanh %84 : vector<2x32xf32>
    %86 = arith.mulf %81, %85 : vector<2x32xf32>
    %87 = arith.truncf %86 : vector<2x32xf32> to vector<2x32xbf16>
    %88 = arith.index_cast %c1_i32 : i32 to index
    %c0_33 = arith.constant 0 : index
    %c0_34 = arith.constant 0 : index
    %89 = vector.load %arg16[%88, %c0_33, %c0_34] : memref<8x2x32xbf16, #tpu.memory_space<vmem>>, vector<1x2x32xbf16>
    %90 = vector.shape_cast %89 : vector<1x2x32xbf16> to vector<2x32xbf16>
    %91 = vector.shape_cast %87 : vector<2x32xbf16> to vector<1x2x32xbf16>
    tpu.vector_store %arg16[%88, %c0_33, %c0_34], %91 {strides = array<i32>} : memref<8x2x32xbf16, #tpu.memory_space<vmem>>, vector<1x2x32xbf16>,
    %c2_i32 = arith.constant 2 : i32
    %92 = arith.index_cast %c2_i32 : i32 to index
    %c0_35 = arith.constant 0 : index
    %c0_36 = arith.constant 0 : index
    %93 = vector.load %arg15[%92, %c0_35, %c0_36] : memref<8x2x128xf32, #tpu.memory_space<vmem>>, vector<1x2x128xf32>
    %94 = vector.shape_cast %93 : vector<1x2x128xf32> to vector<2x128xf32>
    %95 = arith.truncf %86 : vector<2x32xf32> to vector<2x32xbf16>
    %cst_37 = arith.constant dense<0.000000e+00> : vector<2x128xf32>
    %96 = tpu.matmul %95, %17, %cst_37 {dimension_numbers = #tpu.dot_dimension_numbers<[1], [0], [0], [1], [0, 0, 1, 1], [], []>} : vector<2x32xbf16>, vector<32x128xbf16>, vector<2x128xf32> -> vector<2x128xf32>
    %97 = arith.addf %94, %96 : vector<2x128xf32>
    %98 = vector.extract_strided_slice %97 {offsets = [0, 0], sizes = [2, 32], strides = [1, 1]} : vector<2x128xf32> to vector<2x32xf32>
    %99 = arith.negf %98 : vector<2x32xf32>
    %100 = math.exp %99 : vector<2x32xf32>
    %cst_38 = arith.constant 1.000000e+00 : f32
    %101 = vector.broadcast %cst_38 : f32 to vector<2x32xf32>
    %102 = arith.addf %101, %100 : vector<2x32xf32>
    %103 = arith.divf %101, %102 : vector<2x32xf32>
    %104 = vector.extract_strided_slice %97 {offsets = [0, 32], sizes = [2, 32], strides = [1, 1]} : vector<2x128xf32> to vector<2x32xf32>
    %105 = arith.negf %104 : vector<2x32xf32>
    %106 = math.exp %105 : vector<2x32xf32>
    %cst_39 = arith.constant 1.000000e+00 : f32
    %107 = vector.broadcast %cst_39 : f32 to vector<2x32xf32>
    %108 = arith.addf %107, %106 : vector<2x32xf32>
    %109 = arith.divf %107, %108 : vector<2x32xf32>
    %110 = vector.extract_strided_slice %97 {offsets = [0, 64], sizes = [2, 32], strides = [1, 1]} : vector<2x128xf32> to vector<2x32xf32>
    %111 = math.tanh %110 : vector<2x32xf32>
    %112 = vector.extract_strided_slice %97 {offsets = [0, 96], sizes = [2, 32], strides = [1, 1]} : vector<2x128xf32> to vector<2x32xf32>
    %113 = arith.negf %112 : vector<2x32xf32>
    %114 = math.exp %113 : vector<2x32xf32>
    %cst_40 = arith.constant 1.000000e+00 : f32
    %115 = vector.broadcast %cst_40 : f32 to vector<2x32xf32>
    %116 = arith.addf %115, %114 : vector<2x32xf32>
    %117 = arith.divf %115, %116 : vector<2x32xf32>
    %118 = arith.mulf %109, %84 : vector<2x32xf32>
    %119 = arith.mulf %103, %111 : vector<2x32xf32>
    %120 = arith.addf %118, %119 : vector<2x32xf32>
    %121 = math.tanh %120 : vector<2x32xf32>
    %122 = arith.mulf %117, %121 : vector<2x32xf32>
    %123 = arith.truncf %122 : vector<2x32xf32> to vector<2x32xbf16>
    %124 = arith.index_cast %c2_i32 : i32 to index
    %c0_41 = arith.constant 0 : index
    %c0_42 = arith.constant 0 : index
    %125 = vector.load %arg16[%124, %c0_41, %c0_42] : memref<8x2x32xbf16, #tpu.memory_space<vmem>>, vector<1x2x32xbf16>
    %126 = vector.shape_cast %125 : vector<1x2x32xbf16> to vector<2x32xbf16>
    %127 = vector.shape_cast %123 : vector<2x32xbf16> to vector<1x2x32xbf16>
    tpu.vector_store %arg16[%124, %c0_41, %c0_42], %127 {strides = array<i32>} : memref<8x2x32xbf16, #tpu.memory_space<vmem>>, vector<1x2x32xbf16>,
    %c3_i32 = arith.constant 3 : i32
    %128 = arith.index_cast %c3_i32 : i32 to index
    %c0_43 = arith.constant 0 : index
    %c0_44 = arith.constant 0 : index
    %129 = vector.load %arg15[%128, %c0_43, %c0_44] : memref<8x2x128xf32, #tpu.memory_space<vmem>>, vector<1x2x128xf32>
    %130 = vector.shape_cast %129 : vector<1x2x128xf32> to vector<2x128xf32>
    %131 = arith.truncf %122 : vector<2x32xf32> to vector<2x32xbf16>
    %cst_45 = arith.constant dense<0.000000e+00> : vector<2x128xf32>
    %132 = tpu.matmul %131, %17, %cst_45 {dimension_numbers = #tpu.dot_dimension_numbers<[1], [0], [0], [1], [0, 0, 1, 1], [], []>} : vector<2x32xbf16>, vector<32x128xbf16>, vector<2x128xf32> -> vector<2x128xf32>
    %133 = arith.addf %130, %132 : vector<2x128xf32>
    %134 = vector.extract_strided_slice %133 {offsets = [0, 0], sizes = [2, 32], strides = [1, 1]} : vector<2x128xf32> to vector<2x32xf32>
    %135 = arith.negf %134 : vector<2x32xf32>
    %136 = math.exp %135 : vector<2x32xf32>
    %cst_46 = arith.constant 1.000000e+00 : f32
    %137 = vector.broadcast %cst_46 : f32 to vector<2x32xf32>
    %138 = arith.addf %137, %136 : vector<2x32xf32>
    %139 = arith.divf %137, %138 : vector<2x32xf32>
    %140 = vector.extract_strided_slice %133 {offsets = [0, 32], sizes = [2, 32], strides = [1, 1]} : vector<2x128xf32> to vector<2x32xf32>
    %141 = arith.negf %140 : vector<2x32xf32>
    %142 = math.exp %141 : vector<2x32xf32>
    %cst_47 = arith.constant 1.000000e+00 : f32
    %143 = vector.broadcast %cst_47 : f32 to vector<2x32xf32>
    %144 = arith.addf %143, %142 : vector<2x32xf32>
    %145 = arith.divf %143, %144 : vector<2x32xf32>
    %146 = vector.extract_strided_slice %133 {offsets = [0, 64], sizes = [2, 32], strides = [1, 1]} : vector<2x128xf32> to vector<2x32xf32>
    %147 = math.tanh %146 : vector<2x32xf32>
    %148 = vector.extract_strided_slice %133 {offsets = [0, 96], sizes = [2, 32], strides = [1, 1]} : vector<2x128xf32> to vector<2x32xf32>
    %149 = arith.negf %148 : vector<2x32xf32>
    %150 = math.exp %149 : vector<2x32xf32>
    %cst_48 = arith.constant 1.000000e+00 : f32
    %151 = vector.broadcast %cst_48 : f32 to vector<2x32xf32>
    %152 = arith.addf %151, %150 : vector<2x32xf32>
    %153 = arith.divf %151, %152 : vector<2x32xf32>
    %154 = arith.mulf %145, %120 : vector<2x32xf32>
    %155 = arith.mulf %139, %147 : vector<2x32xf32>
    %156 = arith.addf %154, %155 : vector<2x32xf32>
    %157 = math.tanh %156 : vector<2x32xf32>
    %158 = arith.mulf %153, %157 : vector<2x32xf32>
    %159 = arith.truncf %158 : vector<2x32xf32> to vector<2x32xbf16>
    %160 = arith.index_cast %c3_i32 : i32 to index
    %c0_49 = arith.constant 0 : index
    %c0_50 = arith.constant 0 : index
    %161 = vector.load %arg16[%160, %c0_49, %c0_50] : memref<8x2x32xbf16, #tpu.memory_space<vmem>>, vector<1x2x32xbf16>
    %162 = vector.shape_cast %161 : vector<1x2x32xbf16> to vector<2x32xbf16>
    %163 = vector.shape_cast %159 : vector<2x32xbf16> to vector<1x2x32xbf16>
    tpu.vector_store %arg16[%160, %c0_49, %c0_50], %163 {strides = array<i32>} : memref<8x2x32xbf16, #tpu.memory_space<vmem>>, vector<1x2x32xbf16>,
    %c4_i32 = arith.constant 4 : i32
    %164 = arith.index_cast %c4_i32 : i32 to index
    %c0_51 = arith.constant 0 : index
    %c0_52 = arith.constant 0 : index
    %165 = vector.load %arg15[%164, %c0_51, %c0_52] : memref<8x2x128xf32, #tpu.memory_space<vmem>>, vector<1x2x128xf32>
    %166 = vector.shape_cast %165 : vector<1x2x128xf32> to vector<2x128xf32>
    %167 = arith.truncf %158 : vector<2x32xf32> to vector<2x32xbf16>
    %cst_53 = arith.constant dense<0.000000e+00> : vector<2x128xf32>
    %168 = tpu.matmul %167, %17, %cst_53 {dimension_numbers = #tpu.dot_dimension_numbers<[1], [0], [0], [1], [0, 0, 1, 1], [], []>} : vector<2x32xbf16>, vector<32x128xbf16>, vector<2x128xf32> -> vector<2x128xf32>
    %169 = arith.addf %166, %168 : vector<2x128xf32>
    %170 = vector.extract_strided_slice %169 {offsets = [0, 0], sizes = [2, 32], strides = [1, 1]} : vector<2x128xf32> to vector<2x32xf32>
    %171 = arith.negf %170 : vector<2x32xf32>
    %172 = math.exp %171 : vector<2x32xf32>
    %cst_54 = arith.constant 1.000000e+00 : f32
    %173 = vector.broadcast %cst_54 : f32 to vector<2x32xf32>
    %174 = arith.addf %173, %172 : vector<2x32xf32>
    %175 = arith.divf %173, %174 : vector<2x32xf32>
    %176 = vector.extract_strided_slice %169 {offsets = [0, 32], sizes = [2, 32], strides = [1, 1]} : vector<2x128xf32> to vector<2x32xf32>
    %177 = arith.negf %176 : vector<2x32xf32>
    %178 = math.exp %177 : vector<2x32xf32>
    %cst_55 = arith.constant 1.000000e+00 : f32
    %179 = vector.broadcast %cst_55 : f32 to vector<2x32xf32>
    %180 = arith.addf %179, %178 : vector<2x32xf32>
    %181 = arith.divf %179, %180 : vector<2x32xf32>
    %182 = vector.extract_strided_slice %169 {offsets = [0, 64], sizes = [2, 32], strides = [1, 1]} : vector<2x128xf32> to vector<2x32xf32>
    %183 = math.tanh %182 : vector<2x32xf32>
    %184 = vector.extract_strided_slice %169 {offsets = [0, 96], sizes = [2, 32], strides = [1, 1]} : vector<2x128xf32> to vector<2x32xf32>
    %185 = arith.negf %184 : vector<2x32xf32>
    %186 = math.exp %185 : vector<2x32xf32>
    %cst_56 = arith.constant 1.000000e+00 : f32
    %187 = vector.broadcast %cst_56 : f32 to vector<2x32xf32>
    %188 = arith.addf %187, %186 : vector<2x32xf32>
    %189 = arith.divf %187, %188 : vector<2x32xf32>
    %190 = arith.mulf %181, %156 : vector<2x32xf32>
    %191 = arith.mulf %175, %183 : vector<2x32xf32>
    %192 = arith.addf %190, %191 : vector<2x32xf32>
    %193 = math.tanh %192 : vector<2x32xf32>
    %194 = arith.mulf %189, %193 : vector<2x32xf32>
    %195 = arith.truncf %194 : vector<2x32xf32> to vector<2x32xbf16>
    %196 = arith.index_cast %c4_i32 : i32 to index
    %c0_57 = arith.constant 0 : index
    %c0_58 = arith.constant 0 : index
    %197 = vector.load %arg16[%196, %c0_57, %c0_58] : memref<8x2x32xbf16, #tpu.memory_space<vmem>>, vector<1x2x32xbf16>
    %198 = vector.shape_cast %197 : vector<1x2x32xbf16> to vector<2x32xbf16>
    %199 = vector.shape_cast %195 : vector<2x32xbf16> to vector<1x2x32xbf16>
    tpu.vector_store %arg16[%196, %c0_57, %c0_58], %199 {strides = array<i32>} : memref<8x2x32xbf16, #tpu.memory_space<vmem>>, vector<1x2x32xbf16>,
    %c5_i32 = arith.constant 5 : i32
    %200 = arith.index_cast %c5_i32 : i32 to index
    %c0_59 = arith.constant 0 : index
    %c0_60 = arith.constant 0 : index
    %201 = vector.load %arg15[%200, %c0_59, %c0_60] : memref<8x2x128xf32, #tpu.memory_space<vmem>>, vector<1x2x128xf32>
    %202 = vector.shape_cast %201 : vector<1x2x128xf32> to vector<2x128xf32>
    %203 = arith.truncf %194 : vector<2x32xf32> to vector<2x32xbf16>
    %cst_61 = arith.constant dense<0.000000e+00> : vector<2x128xf32>
    %204 = tpu.matmul %203, %17, %cst_61 {dimension_numbers = #tpu.dot_dimension_numbers<[1], [0], [0], [1], [0, 0, 1, 1], [], []>} : vector<2x32xbf16>, vector<32x128xbf16>, vector<2x128xf32> -> vector<2x128xf32>
    %205 = arith.addf %202, %204 : vector<2x128xf32>
    %206 = vector.extract_strided_slice %205 {offsets = [0, 0], sizes = [2, 32], strides = [1, 1]} : vector<2x128xf32> to vector<2x32xf32>
    %207 = arith.negf %206 : vector<2x32xf32>
    %208 = math.exp %207 : vector<2x32xf32>
    %cst_62 = arith.constant 1.000000e+00 : f32
    %209 = vector.broadcast %cst_62 : f32 to vector<2x32xf32>
    %210 = arith.addf %209, %208 : vector<2x32xf32>
    %211 = arith.divf %209, %210 : vector<2x32xf32>
    %212 = vector.extract_strided_slice %205 {offsets = [0, 32], sizes = [2, 32], strides = [1, 1]} : vector<2x128xf32> to vector<2x32xf32>
    %213 = arith.negf %212 : vector<2x32xf32>
    %214 = math.exp %213 : vector<2x32xf32>
    %cst_63 = arith.constant 1.000000e+00 : f32
    %215 = vector.broadcast %cst_63 : f32 to vector<2x32xf32>
    %216 = arith.addf %215, %214 : vector<2x32xf32>
    %217 = arith.divf %215, %216 : vector<2x32xf32>
    %218 = vector.extract_strided_slice %205 {offsets = [0, 64], sizes = [2, 32], strides = [1, 1]} : vector<2x128xf32> to vector<2x32xf32>
    %219 = math.tanh %218 : vector<2x32xf32>
    %220 = vector.extract_strided_slice %205 {offsets = [0, 96], sizes = [2, 32], strides = [1, 1]} : vector<2x128xf32> to vector<2x32xf32>
    %221 = arith.negf %220 : vector<2x32xf32>
    %222 = math.exp %221 : vector<2x32xf32>
    %cst_64 = arith.constant 1.000000e+00 : f32
    %223 = vector.broadcast %cst_64 : f32 to vector<2x32xf32>
    %224 = arith.addf %223, %222 : vector<2x32xf32>
    %225 = arith.divf %223, %224 : vector<2x32xf32>
    %226 = arith.mulf %217, %192 : vector<2x32xf32>
    %227 = arith.mulf %211, %219 : vector<2x32xf32>
    %228 = arith.addf %226, %227 : vector<2x32xf32>
    %229 = math.tanh %228 : vector<2x32xf32>
    %230 = arith.mulf %225, %229 : vector<2x32xf32>
    %231 = arith.truncf %230 : vector<2x32xf32> to vector<2x32xbf16>
    %232 = arith.index_cast %c5_i32 : i32 to index
    %c0_65 = arith.constant 0 : index
    %c0_66 = arith.constant 0 : index
    %233 = vector.load %arg16[%232, %c0_65, %c0_66] : memref<8x2x32xbf16, #tpu.memory_space<vmem>>, vector<1x2x32xbf16>
    %234 = vector.shape_cast %233 : vector<1x2x32xbf16> to vector<2x32xbf16>
    %235 = vector.shape_cast %231 : vector<2x32xbf16> to vector<1x2x32xbf16>
    tpu.vector_store %arg16[%232, %c0_65, %c0_66], %235 {strides = array<i32>} : memref<8x2x32xbf16, #tpu.memory_space<vmem>>, vector<1x2x32xbf16>,
    %c6_i32 = arith.constant 6 : i32
    %236 = arith.index_cast %c6_i32 : i32 to index
    %c0_67 = arith.constant 0 : index
    %c0_68 = arith.constant 0 : index
    %237 = vector.load %arg15[%236, %c0_67, %c0_68] : memref<8x2x128xf32, #tpu.memory_space<vmem>>, vector<1x2x128xf32>
    %238 = vector.shape_cast %237 : vector<1x2x128xf32> to vector<2x128xf32>
    %239 = arith.truncf %230 : vector<2x32xf32> to vector<2x32xbf16>
    %cst_69 = arith.constant dense<0.000000e+00> : vector<2x128xf32>
    %240 = tpu.matmul %239, %17, %cst_69 {dimension_numbers = #tpu.dot_dimension_numbers<[1], [0], [0], [1], [0, 0, 1, 1], [], []>} : vector<2x32xbf16>, vector<32x128xbf16>, vector<2x128xf32> -> vector<2x128xf32>
    %241 = arith.addf %238, %240 : vector<2x128xf32>
    %242 = vector.extract_strided_slice %241 {offsets = [0, 0], sizes = [2, 32], strides = [1, 1]} : vector<2x128xf32> to vector<2x32xf32>
    %243 = arith.negf %242 : vector<2x32xf32>
    %244 = math.exp %243 : vector<2x32xf32>
    %cst_70 = arith.constant 1.000000e+00 : f32
    %245 = vector.broadcast %cst_70 : f32 to vector<2x32xf32>
    %246 = arith.addf %245, %244 : vector<2x32xf32>
    %247 = arith.divf %245, %246 : vector<2x32xf32>
    %248 = vector.extract_strided_slice %241 {offsets = [0, 32], sizes = [2, 32], strides = [1, 1]} : vector<2x128xf32> to vector<2x32xf32>
    %249 = arith.negf %248 : vector<2x32xf32>
    %250 = math.exp %249 : vector<2x32xf32>
    %cst_71 = arith.constant 1.000000e+00 : f32
    %251 = vector.broadcast %cst_71 : f32 to vector<2x32xf32>
    %252 = arith.addf %251, %250 : vector<2x32xf32>
    %253 = arith.divf %251, %252 : vector<2x32xf32>
    %254 = vector.extract_strided_slice %241 {offsets = [0, 64], sizes = [2, 32], strides = [1, 1]} : vector<2x128xf32> to vector<2x32xf32>
    %255 = math.tanh %254 : vector<2x32xf32>
    %256 = vector.extract_strided_slice %241 {offsets = [0, 96], sizes = [2, 32], strides = [1, 1]} : vector<2x128xf32> to vector<2x32xf32>
    %257 = arith.negf %256 : vector<2x32xf32>
    %258 = math.exp %257 : vector<2x32xf32>
    %cst_72 = arith.constant 1.000000e+00 : f32
    %259 = vector.broadcast %cst_72 : f32 to vector<2x32xf32>
    %260 = arith.addf %259, %258 : vector<2x32xf32>
    %261 = arith.divf %259, %260 : vector<2x32xf32>
    %262 = arith.mulf %253, %228 : vector<2x32xf32>
    %263 = arith.mulf %247, %255 : vector<2x32xf32>
    %264 = arith.addf %262, %263 : vector<2x32xf32>
    %265 = math.tanh %264 : vector<2x32xf32>
    %266 = arith.mulf %261, %265 : vector<2x32xf32>
    %267 = arith.truncf %266 : vector<2x32xf32> to vector<2x32xbf16>
    %268 = arith.index_cast %c6_i32 : i32 to index
    %c0_73 = arith.constant 0 : index
    %c0_74 = arith.constant 0 : index
    %269 = vector.load %arg16[%268, %c0_73, %c0_74] : memref<8x2x32xbf16, #tpu.memory_space<vmem>>, vector<1x2x32xbf16>
    %270 = vector.shape_cast %269 : vector<1x2x32xbf16> to vector<2x32xbf16>
    %271 = vector.shape_cast %267 : vector<2x32xbf16> to vector<1x2x32xbf16>
    tpu.vector_store %arg16[%268, %c0_73, %c0_74], %271 {strides = array<i32>} : memref<8x2x32xbf16, #tpu.memory_space<vmem>>, vector<1x2x32xbf16>,
    %c7_i32 = arith.constant 7 : i32
    %272 = arith.index_cast %c7_i32 : i32 to index
    %c0_75 = arith.constant 0 : index
    %c0_76 = arith.constant 0 : index
    %273 = vector.load %arg15[%272, %c0_75, %c0_76] : memref<8x2x128xf32, #tpu.memory_space<vmem>>, vector<1x2x128xf32>
    %274 = vector.shape_cast %273 : vector<1x2x128xf32> to vector<2x128xf32>
    %275 = arith.truncf %266 : vector<2x32xf32> to vector<2x32xbf16>
    %cst_77 = arith.constant dense<0.000000e+00> : vector<2x128xf32>
    %276 = tpu.matmul %275, %17, %cst_77 {dimension_numbers = #tpu.dot_dimension_numbers<[1], [0], [0], [1], [0, 0, 1, 1], [], []>} : vector<2x32xbf16>, vector<32x128xbf16>, vector<2x128xf32> -> vector<2x128xf32>
    %277 = arith.addf %274, %276 : vector<2x128xf32>
    %278 = vector.extract_strided_slice %277 {offsets = [0, 0], sizes = [2, 32], strides = [1, 1]} : vector<2x128xf32> to vector<2x32xf32>
    %279 = arith.negf %278 : vector<2x32xf32>
    %280 = math.exp %279 : vector<2x32xf32>
    %cst_78 = arith.constant 1.000000e+00 : f32
    %281 = vector.broadcast %cst_78 : f32 to vector<2x32xf32>
    %282 = arith.addf %281, %280 : vector<2x32xf32>
    %283 = arith.divf %281, %282 : vector<2x32xf32>
    %284 = vector.extract_strided_slice %277 {offsets = [0, 32], sizes = [2, 32], strides = [1, 1]} : vector<2x128xf32> to vector<2x32xf32>
    %285 = arith.negf %284 : vector<2x32xf32>
    %286 = math.exp %285 : vector<2x32xf32>
    %cst_79 = arith.constant 1.000000e+00 : f32
    %287 = vector.broadcast %cst_79 : f32 to vector<2x32xf32>
    %288 = arith.addf %287, %286 : vector<2x32xf32>
    %289 = arith.divf %287, %288 : vector<2x32xf32>
    %290 = vector.extract_strided_slice %277 {offsets = [0, 64], sizes = [2, 32], strides = [1, 1]} : vector<2x128xf32> to vector<2x32xf32>
    %291 = math.tanh %290 : vector<2x32xf32>
    %292 = vector.extract_strided_slice %277 {offsets = [0, 96], sizes = [2, 32], strides = [1, 1]} : vector<2x128xf32> to vector<2x32xf32>
    %293 = arith.negf %292 : vector<2x32xf32>
    %294 = math.exp %293 : vector<2x32xf32>
    %cst_80 = arith.constant 1.000000e+00 : f32
    %295 = vector.broadcast %cst_80 : f32 to vector<2x32xf32>
    %296 = arith.addf %295, %294 : vector<2x32xf32>
    %297 = arith.divf %295, %296 : vector<2x32xf32>
    %298 = arith.mulf %289, %264 : vector<2x32xf32>
    %299 = arith.mulf %283, %291 : vector<2x32xf32>
    %300 = arith.addf %298, %299 : vector<2x32xf32>
    %301 = math.tanh %300 : vector<2x32xf32>
    %302 = arith.mulf %297, %301 : vector<2x32xf32>
    %303 = arith.truncf %302 : vector<2x32xf32> to vector<2x32xbf16>
    %304 = arith.index_cast %c7_i32 : i32 to index
    %c0_81 = arith.constant 0 : index
    %c0_82 = arith.constant 0 : index
    %305 = vector.load %arg16[%304, %c0_81, %c0_82] : memref<8x2x32xbf16, #tpu.memory_space<vmem>>, vector<1x2x32xbf16>
    %306 = vector.shape_cast %305 : vector<1x2x32xbf16> to vector<2x32xbf16>
    %307 = vector.shape_cast %303 : vector<2x32xbf16> to vector<1x2x32xbf16>
    tpu.vector_store %arg16[%304, %c0_81, %c0_82], %307 {strides = array<i32>} : memref<8x2x32xbf16, #tpu.memory_space<vmem>>, vector<1x2x32xbf16>,
    %c8_i32 = arith.constant 8 : i32
    %c0_83 = arith.constant 0 : index
    %c0_84 = arith.constant 0 : index
    %c0_85 = arith.constant 0 : index
    %308 = vector.load %arg16[%c0_83, %c0_84, %c0_85] : memref<8x2x32xbf16, #tpu.memory_space<vmem>>, vector<8x2x32xbf16>
    %309 = vector.shape_cast %308 : vector<8x2x32xbf16> to vector<16x32xbf16>
    %c0_86 = arith.constant 0 : index
    %c0_87 = arith.constant 0 : index
    %310 = vector.load %arg7[%c0_86, %c0_87] : memref<32x16xbf16, #tpu.memory_space<vmem>>, vector<32x16xbf16>
    %cst_88 = arith.constant dense<0.000000e+00> : vector<16x16xf32>
    %311 = tpu.matmul %309, %310, %cst_88 {dimension_numbers = #tpu.dot_dimension_numbers<[1], [0], [0], [1], [0, 0, 1, 1], [], []>} : vector<16x32xbf16>, vector<32x16xbf16>, vector<16x16xf32> -> vector<16x16xf32>
    %c0_89 = arith.constant 0 : index
    %c0_90 = arith.constant 0 : index
    %312 = vector.load %arg8[%c0_89, %c0_90] : memref<1x16xf32, #tpu.memory_space<vmem>>, vector<1x16xf32>
    %313 = vector.broadcast %312 : vector<1x16xf32> to vector<16x16xf32>
    %314 = arith.addf %311, %313 : vector<16x16xf32>
    %315 = math.tanh %314 : vector<16x16xf32>
    %c0_91 = arith.constant 0 : index
    %c0_92 = arith.constant 0 : index
    %316 = vector.load %arg9[%c0_91, %c0_92] : memref<1x16xf32, #tpu.memory_space<vmem>>, vector<1x16xf32>
    %317 = vector.broadcast %316 : vector<1x16xf32> to vector<16x16xf32>
    %318 = arith.mulf %315, %317 : vector<16x16xf32>
    %cst_93 = arith.constant dense<0.000000e+00> : vector<16xf32>
    %319 = vector.multi_reduction <add>, %318, %cst_93 [1] : vector<16x16xf32> to vector<16xf32>
    %320 = vector.shape_cast %319 : vector<16xf32> to vector<16x1xf32>
    %321 = vector.shape_cast %320 : vector<16x1xf32> to vector<8x2x1xf32>
    %cst_94 = arith.constant dense<0xFF800000> : vector<2x1xf32>
    %322 = vector.multi_reduction <maximumf>, %321, %cst_94 [0] : vector<8x2x1xf32> to vector<2x1xf32>
    %323 = vector.shape_cast %322 : vector<2x1xf32> to vector<1x2x1xf32>
    %324 = vector.broadcast %323 : vector<1x2x1xf32> to vector<8x2x1xf32>
    %325 = arith.subf %321, %324 : vector<8x2x1xf32>
    %326 = math.exp %325 : vector<8x2x1xf32>
    %cst_95 = arith.constant dense<0.000000e+00> : vector<2x1xf32>
    %327 = vector.multi_reduction <add>, %326, %cst_95 [0] : vector<8x2x1xf32> to vector<2x1xf32>
    %328 = vector.shape_cast %327 : vector<2x1xf32> to vector<1x2x1xf32>
    %329 = tpu.reciprocal %328 {approx = true} : vector<1x2x1xf32> -> vector<1x2x1xf32>
    %330 = vector.broadcast %329 : vector<1x2x1xf32> to vector<8x2x1xf32>
    %331 = arith.mulf %326, %330 : vector<8x2x1xf32>
    %332 = arith.extf %308 : vector<8x2x32xbf16> to vector<8x2x32xf32>
    %333 = vector.broadcast %331 : vector<8x2x1xf32> to vector<8x2x32xf32>
    %334 = arith.mulf %333, %332 : vector<8x2x32xf32>
    %cst_96 = arith.constant dense<0.000000e+00> : vector<2x32xf32>
    %335 = vector.multi_reduction <add>, %334, %cst_96 [0] : vector<8x2x32xf32> to vector<2x32xf32>
    %336 = arith.truncf %335 : vector<2x32xf32> to vector<2x32xbf16>
    %c0_97 = arith.constant 0 : index
    %c0_98 = arith.constant 0 : index
    %337 = vector.load %arg10[%c0_97, %c0_98] : memref<32x64xbf16, #tpu.memory_space<vmem>>, vector<32x64xbf16>
    %cst_99 = arith.constant dense<0.000000e+00> : vector<2x64xf32>
    %338 = tpu.matmul %336, %337, %cst_99 {dimension_numbers = #tpu.dot_dimension_numbers<[1], [0], [0], [1], [0, 0, 1, 1], [], []>} : vector<2x32xbf16>, vector<32x64xbf16>, vector<2x64xf32> -> vector<2x64xf32>
    %c0_100 = arith.constant 0 : index
    %c0_101 = arith.constant 0 : index
    %339 = vector.load %arg11[%c0_100, %c0_101] : memref<1x64xf32, #tpu.memory_space<vmem>>, vector<1x64xf32>
    %340 = vector.broadcast %339 : vector<1x64xf32> to vector<2x64xf32>
    %341 = arith.addf %338, %340 : vector<2x64xf32>
    %cst_102 = arith.constant 0.000000e+00 : f32
    %342 = vector.broadcast %cst_102 : f32 to vector<2x64xf32>
    %343 = arith.maximumf %341, %342 : vector<2x64xf32>
    %c0_103 = arith.constant 0 : index
    %c0_104 = arith.constant 0 : index
    %344 = vector.load %arg12[%c0_103, %c0_104] : memref<1x64xbf16, #tpu.memory_space<vmem>>, vector<1x64xbf16>
    %345 = arith.truncf %343 : vector<2x64xf32> to vector<2x64xbf16>
    %cst_105 = arith.constant dense<0.000000e+00> : vector<1x2xf32>
    %346 = tpu.matmul %344, %345, %cst_105 {dimension_numbers = #tpu.dot_dimension_numbers<[1], [1], [0], [0], [0, 0, 1, 0], [], []>} : vector<1x64xbf16>, vector<2x64xbf16>, vector<1x2xf32> -> vector<1x2xf32>
    %c0_106 = arith.constant 0 : index
    %c0_107 = arith.constant 0 : index
    %347 = vector.load %arg13[%c0_106, %c0_107] : memref<1x1xf32, #tpu.memory_space<vmem>>, vector<1x1xf32>
    %348 = vector.broadcast %347 : vector<1x1xf32> to vector<1x2xf32>
    %349 = arith.addf %346, %348 : vector<1x2xf32>
    %c0_108 = arith.constant 0 : index
    %c0_109 = arith.constant 0 : index
    %c0_110 = arith.constant 0 : index
    %350 = vector.load %arg14[%c0_108, %c0_109, %c0_110] : memref<1x1x2xf32, #tpu.memory_space<vmem>>, vector<1x1x2xf32>
    %351 = vector.shape_cast %350 : vector<1x1x2xf32> to vector<1x2xf32>
    %352 = vector.shape_cast %349 : vector<1x2xf32> to vector<1x1x2xf32>
    tpu.vector_store %arg14[%c0_108, %c0_109, %c0_110], %352 {strides = array<i32>} : memref<1x1x2xf32, #tpu.memory_space<vmem>>, vector<1x1x2xf32>,
    return
  }
  func.func @transform_0(%arg0: i32) -> (i32, i32, i32) {
    %c0_i32 = arith.constant 0 : i32
    %c0_i32_0 = arith.constant 0 : i32
    %c0_i32_1 = arith.constant 0 : i32
    return %c0_i32, %arg0, %c0_i32_0 : i32, i32, i32
  }
  func.func @transform_1(%arg0: i32) -> (i32, i32) {
    %c0_i32 = arith.constant 0 : i32
    %c0_i32_0 = arith.constant 0 : i32
    %c0_i32_1 = arith.constant 0 : i32
    return %c0_i32, %c0_i32_0 : i32, i32
  }
  func.func @transform_2(%arg0: i32) -> (i32, i32) {
    %c0_i32 = arith.constant 0 : i32
    %c0_i32_0 = arith.constant 0 : i32
    %c0_i32_1 = arith.constant 0 : i32
    return %c0_i32, %c0_i32_0 : i32, i32
  }
  func.func @transform_3(%arg0: i32) -> (i32, i32) {
    %c0_i32 = arith.constant 0 : i32
    %c0_i32_0 = arith.constant 0 : i32
    %c0_i32_1 = arith.constant 0 : i32
    return %c0_i32, %c0_i32_0 : i32, i32
  }
  func.func @transform_4(%arg0: i32) -> (i32, i32) {
    %c0_i32 = arith.constant 0 : i32
    %c0_i32_0 = arith.constant 0 : i32
    %c0_i32_1 = arith.constant 0 : i32
    return %c0_i32, %c0_i32_0 : i32, i32
  }
  func.func @transform_5(%arg0: i32) -> (i32, i32) {
    %c0_i32 = arith.constant 0 : i32
    %c0_i32_0 = arith.constant 0 : i32
    %c0_i32_1 = arith.constant 0 : i32
    return %c0_i32, %c0_i32_0 : i32, i32
  }
  func.func @transform_6(%arg0: i32) -> (i32, i32) {
    %c0_i32 = arith.constant 0 : i32
    %c0_i32_0 = arith.constant 0 : i32
    %c0_i32_1 = arith.constant 0 : i32
    return %c0_i32, %c0_i32_0 : i32, i32
  }
  func.func @transform_7(%arg0: i32) -> (i32, i32) {
    %c0_i32 = arith.constant 0 : i32
    %c0_i32_0 = arith.constant 0 : i32
    %c0_i32_1 = arith.constant 0 : i32
    return %c0_i32, %c0_i32_0 : i32, i32
  }
  func.func @transform_8(%arg0: i32) -> (i32, i32) {
    %c0_i32 = arith.constant 0 : i32
    %c0_i32_0 = arith.constant 0 : i32
    %c0_i32_1 = arith.constant 0 : i32
    return %c0_i32, %c0_i32_0 : i32, i32
  }
  func.func @transform_9(%arg0: i32) -> (i32, i32) {
    %c0_i32 = arith.constant 0 : i32
    %c0_i32_0 = arith.constant 0 : i32
    %c0_i32_1 = arith.constant 0 : i32
    return %c0_i32, %c0_i32_0 : i32, i32
  }
  func.func @transform_10(%arg0: i32) -> (i32, i32) {
    %c0_i32 = arith.constant 0 : i32
    %c0_i32_0 = arith.constant 0 : i32
    %c0_i32_1 = arith.constant 0 : i32
    return %c0_i32, %c0_i32_0 : i32, i32
  }
  func.func @transform_11(%arg0: i32) -> (i32, i32) {
    %c0_i32 = arith.constant 0 : i32
    %c0_i32_0 = arith.constant 0 : i32
    %c0_i32_1 = arith.constant 0 : i32
    return %c0_i32, %c0_i32_0 : i32, i32
  }
  func.func @transform_12(%arg0: i32) -> (i32, i32) {
    %c0_i32 = arith.constant 0 : i32
    %c0_i32_0 = arith.constant 0 : i32
    %c0_i32_1 = arith.constant 0 : i32
    return %c0_i32, %c0_i32_0 : i32, i32
  }
  func.func @transform_13(%arg0: i32) -> (i32, i32, i32) {
    %c0_i32 = arith.constant 0 : i32
    %c0_i32_0 = arith.constant 0 : i32
    %c0_i32_1 = arith.constant 0 : i32
    return %arg0, %c0_i32, %c0_i32_0 : i32, i32, i32
  }
}

</mosaic_0001>

<llo_original>
// kernel: improved_cnn_lstm_attention.1
$region0: #{improved_cnn_lstm_attention.1}
  #allocation0 [shape = 'u32[]', space=smem, size = 0x4, offset = 0x4, fixed_abs, tag = 'smem constant byte address 0x4 - core index']
  #allocation1 [shape = 'u32[144,128]{1,0:T(1,128)}', space=vmem, size = 0x12000, scoped, tag = 'internal scratch']
  #allocation2 [shape = 'f32[8,2,128]{2,1,0:T(2,128)}', space=vmem, size = 0x2000, scoped, tag = 'scratch operand']
  #allocation3 [shape = 'bf16[8,2,32]{2,1,0:T(2,128)(2,1)}', space=vmem, size = 0x1000, scoped, tag = 'scratch operand']
  #allocation4 [shape = 'f32[1,1]{1,0:T(1,128)S(1)}', space=vmem, size = 0x200, scoped, tag = 'scoped memory for improved_cnn_lstm_attention.1']
  %s0 = inlined_call_operand.vmem [shape: bf16[8,2,12], index: 0, kind: input, shape index: {}]
  %s1 = inlined_call_operand.vmem [shape: bf16[12,16], index: 1, kind: input, shape index: {}]
  %s2 = inlined_call_operand.vmem [shape: f32[1,16], index: 2, kind: input, shape index: {}]
  %s3 = inlined_call_operand.vmem [shape: bf16[16,128], index: 3, kind: input, shape index: {}]
  %s4 = inlined_call_operand.vmem [shape: bf16[32,128], index: 4, kind: input, shape index: {}]
  %s5 = inlined_call_operand.vmem [shape: f32[1,128], index: 5, kind: input, shape index: {}]
  %s6 = inlined_call_operand.vmem [shape: bf16[32,16], index: 6, kind: input, shape index: {}]
  %s7 = inlined_call_operand.vmem [shape: f32[1,16], index: 7, kind: input, shape index: {}]
  %s8 = inlined_call_operand.vmem [shape: f32[1,16], index: 8, kind: input, shape index: {}]
  %s9 = inlined_call_operand.vmem [shape: bf16[32,64], index: 9, kind: input, shape index: {}]
  %s10 = inlined_call_operand.vmem [shape: f32[1,64], index: 10, kind: input, shape index: {}]
  %s11 = inlined_call_operand.vmem [shape: bf16[1,64], index: 11, kind: input, shape index: {}]
  %s12 = inlined_call_operand.<no memory space> [shape: f32[1,1], index: 12, kind: input, shape index: {}]
  %s13 = inlined_call_operand.hbm [shape: f32[1,1,2], index: 13, kind: output, shape index: {}]
  %s14 = sld [smem:[#allocation0]]
  $region62: #{improved_cnn_lstm_attention.1} parent=0
    _
  %s16 = ssub.s32 1, %s14
  %s17 = scalar_select 0, %s16, %s14
  %v18 = vstv %s12
  %19 = vst [vmem:[#allocation4] sm:$0x1] %v18
  $region1: #{improved_cnn_lstm_attention.1} parent=0
    #allocation5 [shape = 'u8[512]{0}', space=vmem, size = 0x400, scoped, tag = 'output window, operand 0, single buffered']
    #allocation6 [shape = 's32[1]{0}', space=sflag, size = 0x4, scoped, tag = 'scoped memory for improved_cnn_lstm_attention.1']
    %20 = vsyncpa [#allocation6], 0
    // Predicated region
    $region2: #{improved_cnn_lstm_attention.1} parent=1 // pred_check
      _
    $region3: #{improved_cnn_lstm_attention.1} parent=1 // pred_check_branch
      %22 = sbr.rel (0) target = $region5
    $region4: #{improved_cnn_lstm_attention.1} parent=1 // pred_region
      _
    $region5: #{improved_cnn_lstm_attention.1} parent=1 // pred_fallthru
      _
    // Predicated region
    $region6: #{improved_cnn_lstm_attention.1} parent=1 // pred_check
      _
    $region7: #{improved_cnn_lstm_attention.1} parent=1 // pred_check_branch
      %24 = sbr.rel (0) target = $region9
    $region8: #{improved_cnn_lstm_attention.1} parent=1 // pred_region
      _
    $region9: #{improved_cnn_lstm_attention.1} parent=1 // pred_fallthru
      _
    // Predicated region
    $region10: #{improved_cnn_lstm_attention.1} parent=1 // pred_check
      _
    $region11: #{improved_cnn_lstm_attention.1} parent=1 // pred_check_branch
      %26 = sbr.rel (0) target = $region13
    $region12: #{improved_cnn_lstm_attention.1} parent=1 // pred_region
      _
    $region13: #{improved_cnn_lstm_attention.1} parent=1 // pred_fallthru
      _
    // Predicated region
    $region14: #{improved_cnn_lstm_attention.1} parent=1 // pred_check
      _
    $region15: #{improved_cnn_lstm_attention.1} parent=1 // pred_check_branch
      %28 = sbr.rel (0) target = $region17
    $region16: #{improved_cnn_lstm_attention.1} parent=1 // pred_region
      _
    $region17: #{improved_cnn_lstm_attention.1} parent=1 // pred_fallthru
      _
    // Predicated region
    $region18: #{improved_cnn_lstm_attention.1} parent=1 // pred_check
      _
    $region19: #{improved_cnn_lstm_attention.1} parent=1 // pred_check_branch
      %30 = sbr.rel (0) target = $region21
    $region20: #{improved_cnn_lstm_attention.1} parent=1 // pred_region
      _
    $region21: #{improved_cnn_lstm_attention.1} parent=1 // pred_fallthru
      _
    // Predicated region
    $region22: #{improved_cnn_lstm_attention.1} parent=1 // pred_check
      _
    $region23: #{improved_cnn_lstm_attention.1} parent=1 // pred_check_branch
      %32 = sbr.rel (0) target = $region25
    $region24: #{improved_cnn_lstm_attention.1} parent=1 // pred_region
      _
    $region25: #{improved_cnn_lstm_attention.1} parent=1 // pred_fallthru
      _
    // Predicated region
    $region26: #{improved_cnn_lstm_attention.1} parent=1 // pred_check
      _
    $region27: #{improved_cnn_lstm_attention.1} parent=1 // pred_check_branch
      %34 = sbr.rel (0) target = $region29
    $region28: #{improved_cnn_lstm_attention.1} parent=1 // pred_region
      _
    $region29: #{improved_cnn_lstm_attention.1} parent=1 // pred_fallthru
      _
    // Predicated region
    $region30: #{improved_cnn_lstm_attention.1} parent=1 // pred_check
      _
    $region31: #{improved_cnn_lstm_attention.1} parent=1 // pred_check_branch
      %36 = sbr.rel (0) target = $region33
    $region32: #{improved_cnn_lstm_attention.1} parent=1 // pred_region
      _
    $region33: #{improved_cnn_lstm_attention.1} parent=1 // pred_fallthru
      _
    // Predicated region
    $region34: #{improved_cnn_lstm_attention.1} parent=1 // pred_check
      _
    $region35: #{improved_cnn_lstm_attention.1} parent=1 // pred_check_branch
      %38 = sbr.rel (0) target = $region37
    $region36: #{improved_cnn_lstm_attention.1} parent=1 // pred_region
      _
    $region37: #{improved_cnn_lstm_attention.1} parent=1 // pred_fallthru
      _
    // Predicated region
    $region38: #{improved_cnn_lstm_attention.1} parent=1 // pred_check
      _
    $region39: #{improved_cnn_lstm_attention.1} parent=1 // pred_check_branch
      %40 = sbr.rel (0) target = $region41
    $region40: #{improved_cnn_lstm_attention.1} parent=1 // pred_region
      _
    $region41: #{improved_cnn_lstm_attention.1} parent=1 // pred_fallthru
      _
    // Predicated region
    $region42: #{improved_cnn_lstm_attention.1} parent=1 // pred_check
      _
    $region43: #{improved_cnn_lstm_attention.1} parent=1 // pred_check_branch
      %42 = sbr.rel (0) target = $region45
    $region44: #{improved_cnn_lstm_attention.1} parent=1 // pred_region
      _
    $region45: #{improved_cnn_lstm_attention.1} parent=1 // pred_fallthru
      _
    // Predicated region
    $region46: #{improved_cnn_lstm_attention.1} parent=1 // pred_check
      _
    $region47: #{improved_cnn_lstm_attention.1} parent=1 // pred_check_branch
      %44 = sbr.rel (0) target = $region49
    $region48: #{improved_cnn_lstm_attention.1} parent=1 // pred_region
      _
    $region49: #{improved_cnn_lstm_attention.1} parent=1 // pred_fallthru
      _
    // Predicated region
    $region50: #{improved_cnn_lstm_attention.1} parent=1 // pred_check
      _
    $region51: #{improved_cnn_lstm_attention.1} parent=1 // pred_check_branch
      %46 = sbr.rel (0) target = $region53
    $region52: #{improved_cnn_lstm_attention.1} parent=1 // pred_region
      _
    $region53: #{improved_cnn_lstm_attention.1} parent=1 // pred_fallthru
      _
    %v48 = vld [vmem:[%s0] sm:$0x1]
    %v49 = vld [vmem:[%s0 + $0x1] sm:$0x1]
    %v50 = vld [vmem:[%s0 + $0x2] sm:$0x1]
    %v51 = vld [vmem:[%s0 + $0x3] sm:$0x1]
    %v52 = vld [vmem:[%s0 + $0x4] sm:$0x1]
    %v53 = vld [vmem:[%s0 + $0x5] sm:$0x1]
    %v54 = vld [vmem:[%s0 + $0x6] sm:$0x1]
    %v55 = vld [vmem:[%s0 + $0x7] sm:$0x1]
    %v56 = vld [vmem:[%s1] sm:$0xf]
    %v57 = vld [vmem:[%s1 + $0x4] sm:$0x3]
    %v58 = vld [vmem:[%s2] sm:$0x1]
    %v60 = vlaneseq
    %v61 = vshrl.u32 %v60, 7
    %v62 = vsub.s32 0, %v61
    %v63 = vrot.slane %v58, %v62
    %v73 = vcombine.low %v48, %v49
    %v74 = vcombine.low %v50, %v51
    %v75 = vcombine.low %v52, %v53
    %v76 = vcombine.low %v54, %v55
    %v78 = vunpack.c.l.s4 1966171168
    %v79 = vunpack.c.0.s8 %v78
    %v80 = vlaneseq
    %v81 = vshrl.u32 %v80, 7
    %v82 = vsub.s32 %v79, %v81
    %v83 = vrot.slane %v73, %v82
    %v85 = vunpack.c.l.s4 1966171168
    %v86 = vunpack.c.0.s8 %v85
    %v87 = vlaneseq
    %v88 = vshrl.u32 %v87, 7
    %v89 = vsub.s32 %v86, %v88
    %v90 = vrot.slane %v74, %v89
    %v92 = vunpack.c.l.s4 1966171168
    %v93 = vunpack.c.0.s8 %v92
    %v94 = vlaneseq
    %v95 = vshrl.u32 %v94, 7
    %v96 = vsub.s32 %v93, %v95
    %v97 = vrot.slane %v75, %v96
    %v99 = vunpack.c.l.s4 1966171168
    %v100 = vunpack.c.0.s8 %v99
    %v101 = vlaneseq
    %v102 = vshrl.u32 %v101, 7
    %v103 = vsub.s32 %v100, %v102
    %v104 = vrot.slane %v76, %v103
    %v105 = vcombine.low %v83, %v90
    %v106 = vcombine.low %v97, %v104
    %v108 = vunpack.c.l.s4 1966171168
    %v109 = vunpack.c.0.s8 %v108
    %v110 = vlaneseq
    %v111 = vshrl.u32 %v110, 7
    %v112 = vsub.s32 %v109, %v111
    %v113 = vrot.slane %v105, %v112
    %v115 = vunpack.c.l.s4 1966171168
    %v116 = vunpack.c.0.s8 %v115
    %v117 = vlaneseq
    %v118 = vshrl.u32 %v117, 7
    %v119 = vsub.s32 %v116, %v118
    %v120 = vrot.slane %v106, %v119
    %v121 = vcombine.low %v113, %v120
    %v124 = vunpack.c.l.b16 %v56
    %v125 = vunpack.c.l.b16 %v57
    %v126 = vpack.c.b16 %v125, %v124
    %vm127 = vcmask 97280
    %v129 = vsel %vm127, %v121, 0
    %vm131 = vcmask 1045504
    %v133 = vsel %vm131, %v126, 0
    %135 = vmatprep.subr.bf16.mxu0 0
    %136 = vmatpush1.bf16.msra.mxu0 %v133
    %137 = vmatprep.subr.bf16.mxu0 0
    %138 = vmatpush1.bf16.msra.mxu0 0
    %139 = vmatprep.subr.bf16.mxu0 0
    %140 = vmatpush1.bf16.msra.mxu0 0
    %141 = vmatprep.subr.bf16.mxu0 0
    %142 = vmatpush1.bf16.msra.mxu0 0
    %143 = vmatprep.subr.bf16.mxu0 0
    %144 = vmatpush1.bf16.msra.mxu0 0
    %145 = vmatprep.subr.bf16.mxu0 0
    %146 = vmatpush1.bf16.msra.mxu0 0
    %147 = vmatprep.subr.bf16.mxu0 0
    %148 = vmatpush1.bf16.msra.mxu0 0
    %149 = vmatprep.subr.bf16.mxu0 0
    %150 = vmatpush1.bf16.msra.mxu0 0
    %151 = vmatprep.subr.bf16.mxu0 0
    %152 = vmatpush1.bf16.msra.mxu0 0
    %153 = vmatprep.subr.bf16.mxu0 0
    %154 = vmatpush1.bf16.msra.mxu0 0
    %155 = vmatprep.subr.bf16.mxu0 0
    %156 = vmatpush1.bf16.msra.mxu0 0
    %157 = vmatprep.subr.bf16.mxu0 0
    %158 = vmatpush1.bf16.msra.mxu0 0
    %159 = vmatprep.subr.bf16.mxu0 0
    %160 = vmatpush1.bf16.msra.mxu0 0
    %161 = vmatprep.subr.bf16.mxu0 0
    %162 = vmatpush1.bf16.msra.mxu0 0
    %163 = vmatprep.subr.bf16.mxu0 0
    %164 = vmatpush1.bf16.msra.mxu0 0
    %165 = vmatprep.subr.bf16.mxu0 0
    %166 = vmatpush1.bf16.msra.mxu0 0
    %167 = vmatprep.mubr.bf16.mxu0 0
    %168 = vmatmul.mubr.bf16.gmra.mrb[0].mxu0 %v129
    %v169 = vpop.f32.mrb[0].mxu0
    %v170 = vadd.f32 %v63, %v169
    %v171 = vpop.f32.mrb[0].mxu0
    %v172 = vpop.f32.mrb[0].mxu0
    %v173 = vadd.f32 %v63, %v172
    %v174 = vpop.f32.mrb[0].mxu0
    %175 = vdwg.mxu0
    %v176 = vmax.f32 %v170, 0.0
    %v177 = vmax.f32 %v173, 0.0
    %v178 = vpack.c.bf16 %v177, %v176
    %v179 = vld [vmem:[%s3] sm:$0xf]
    %v180 = vld [vmem:[%s3 + $0x4] sm:$0xf]
    %v181 = vld [vmem:[%s5] sm:$0x1]
    %v183 = vlaneseq
    %v184 = vshrl.u32 %v183, 7
    %v185 = vsub.s32 0, %v184
    %v186 = vrot.slane %v181, %v185
    %v190 = vunpack.c.l.b16 %v179
    %v191 = vunpack.c.l.b16 %v180
    %v192 = vpack.c.b16 %v191, %v190
    %vm194 = vcmask 130048
    %v196 = vsel %vm194, %v178, 0
    %198 = vmatprep.subr.bf16.mxu0 0
    %199 = vmatpush1.bf16.msra.mxu0 %v192
    %200 = vmatprep.subr.bf16.mxu0 0
    %201 = vmatpush1.bf16.msra.mxu0 0
    %202 = vmatprep.subr.bf16.mxu0 0
    %203 = vmatpush1.bf16.msra.mxu0 0
    %204 = vmatprep.subr.bf16.mxu0 0
    %205 = vmatpush1.bf16.msra.mxu0 0
    %206 = vmatprep.subr.bf16.mxu0 0
    %207 = vmatpush1.bf16.msra.mxu0 0
    %208 = vmatprep.subr.bf16.mxu0 0
    %209 = vmatpush1.bf16.msra.mxu0 0
    %210 = vmatprep.subr.bf16.mxu0 0
    %211 = vmatpush1.bf16.msra.mxu0 0
    %212 = vmatprep.subr.bf16.mxu0 0
    %213 = vmatpush1.bf16.msra.mxu0 0
    %214 = vmatprep.subr.bf16.mxu0 0
    %215 = vmatpush1.bf16.msra.mxu0 0
    %216 = vmatprep.subr.bf16.mxu0 0
    %217 = vmatpush1.bf16.msra.mxu0 0
    %218 = vmatprep.subr.bf16.mxu0 0
    %219 = vmatpush1.bf16.msra.mxu0 0
    %220 = vmatprep.subr.bf16.mxu0 0
    %221 = vmatpush1.bf16.msra.mxu0 0
    %222 = vmatprep.subr.bf16.mxu0 0
    %223 = vmatpush1.bf16.msra.mxu0 0
    %224 = vmatprep.subr.bf16.mxu0 0
    %225 = vmatpush1.bf16.msra.mxu0 0
    %226 = vmatprep.subr.bf16.mxu0 0
    %227 = vmatpush1.bf16.msra.mxu0 0
    %228 = vmatprep.subr.bf16.mxu0 0
    %229 = vmatpush1.bf16.msra.mxu0 0
    %230 = vmatprep.mubr.bf16.mxu0 0
    %231 = vmatmul.mubr.bf16.gmra.mrb[0].mxu0 %v196
    %v232 = vpop.f32.mrb[0].mxu0
    %v233 = vadd.f32 %v186, %v232
    %v234 = vpop.f32.mrb[0].mxu0
    %v235 = vpop.f32.mrb[0].mxu0
    %v236 = vadd.f32 %v186, %v235
    %v237 = vpop.f32.mrb[0].mxu0
    %238 = vdwg.mxu0
    %v241 = vcombine.high %v233, %v233
    %v243 = vunpack.c.l.s4 1983009808
    %v244 = vunpack.c.0.s8 %v243
    %v245 = vlaneseq
    %v246 = vshrl.u32 %v245, 7
    %v247 = vsub.s32 %v244, %v246
    %v248 = vrot.slane %v233, %v247
    %v250 = vunpack.c.l.s4 1983009808
    %v251 = vunpack.c.0.s8 %v250
    %v252 = vlaneseq
    %v253 = vshrl.u32 %v252, 7
    %v254 = vsub.s32 %v251, %v253
    %v255 = vrot.slane %v241, %v254
    %v256 = vcombine.high %v248, %v248
    %v257 = vcombine.high %v255, %v255
    %v258 = vcombine.high %v236, %v236
    %v260 = vunpack.c.l.s4 1983009808
    %v261 = vunpack.c.0.s8 %v260
    %v262 = vlaneseq
    %v263 = vshrl.u32 %v262, 7
    %v264 = vsub.s32 %v261, %v263
    %v265 = vrot.slane %v236, %v264
    %v267 = vunpack.c.l.s4 1983009808
    %v268 = vunpack.c.0.s8 %v267
    %v269 = vlaneseq
    %v270 = vshrl.u32 %v269, 7
    %v271 = vsub.s32 %v268, %v270
    %v272 = vrot.slane %v258, %v271
    %v273 = vcombine.high %v265, %v265
    %v274 = vcombine.high %v272, %v272
    %283 = vst [vmem:[#allocation2] sm:$0x3] %v248
    %284 = vst [vmem:[#allocation2 + $0x2] sm:$0x3] %v256
    %285 = vst [vmem:[#allocation2 + $0x4] sm:$0x3] %v255
    %286 = vst [vmem:[#allocation2 + $0x6] sm:$0x3] %v257
    %287 = vst [vmem:[#allocation2 + $0x8] sm:$0x3] %v265
    %288 = vst [vmem:[#allocation2 + $0xa] sm:$0x3] %v273
    %289 = vst [vmem:[#allocation2 + $0xc] sm:$0x3] %v272
    %290 = vst [vmem:[#allocation2 + $0xe] sm:$0x3] %v274
    %v291 = vld [vmem:[%s4] sm:$0xf]
    %v292 = vld [vmem:[%s4 + $0x4] sm:$0xf]
    %v293 = vld [vmem:[%s4 + $0x8] sm:$0xf]
    %v294 = vld [vmem:[%s4 + $0xc] sm:$0xf]
    %v295 = vld [vmem:[#allocation2] sm:$0x3]
    %v300 = vunpack.c.l.b16 %v291
    %v301 = vunpack.c.l.b16 %v292
    %v302 = vunpack.c.l.b16 %v293
    %v303 = vunpack.c.l.b16 %v294
    %v304 = vpack.c.b16 %v301, %v300
    %v305 = vpack.c.b16 %v303, %v302
    %vm308 = vcmask 261120
    %v310 = vsel %vm308, 0, 0
    %312 = vmatprep.subr.bf16.mxu0 0
    %313 = vmatpush1.bf16.msra.mxu0 %v304
    %314 = vmatprep.subr.bf16.mxu0 0
    %315 = vmatpush1.bf16.msra.mxu0 %v305
    %316 = vmatprep.subr.bf16.mxu0 0
    %317 = vmatpush1.bf16.msra.mxu0 0
    %318 = vmatprep.subr.bf16.mxu0 0
    %319 = vmatpush1.bf16.msra.mxu0 0
    %320 = vmatprep.subr.bf16.mxu0 0
    %321 = vmatpush1.bf16.msra.mxu0 0
    %322 = vmatprep.subr.bf16.mxu0 0
    %323 = vmatpush1.bf16.msra.mxu0 0
    %324 = vmatprep.subr.bf16.mxu0 0
    %325 = vmatpush1.bf16.msra.mxu0 0
    %326 = vmatprep.subr.bf16.mxu0 0
    %327 = vmatpush1.bf16.msra.mxu0 0
    %328 = vmatprep.subr.bf16.mxu0 0
    %329 = vmatpush1.bf16.msra.mxu0 0
    %330 = vmatprep.subr.bf16.mxu0 0
    %331 = vmatpush1.bf16.msra.mxu0 0
    %332 = vmatprep.subr.bf16.mxu0 0
    %333 = vmatpush1.bf16.msra.mxu0 0
    %334 = vmatprep.subr.bf16.mxu0 0
    %335 = vmatpush1.bf16.msra.mxu0 0
    %336 = vmatprep.subr.bf16.mxu0 0
    %337 = vmatpush1.bf16.msra.mxu0 0
    %338 = vmatprep.subr.bf16.mxu0 0
    %339 = vmatpush1.bf16.msra.mxu0 0
    %340 = vmatprep.subr.bf16.mxu0 0
    %341 = vmatpush1.bf16.msra.mxu0 0
    %342 = vmatprep.subr.bf16.mxu0 0
    %343 = vmatpush1.bf16.msra.mxu0 0
    %344 = vmatprep.mubr.bf16.mxu0 0
    %345 = vmatmul.mubr.bf16.gmra.mrb[0].mxu0 %v310
    %v346 = vpop.f32.mrb[0].mxu0
    %v347 = vadd.f32 0.0, %v346
    %v348 = vpop.f32.mrb[0].mxu0
    %v349 = vpop.f32.mrb[0].mxu0
    %v350 = vpop.f32.mrb[0].mxu0
    %351 = vdwg.mxu0
    %v352 = vadd.f32 %v295, %v347
    %v353 = vxor.u32 %v352, 2147483648
    %v354 = vmul.f32 %v353, 1.442695
    %v355 = vpow.pop %v354
    %v356 = vadd.f32 %v355, 1.0
    %v357 = vrcp.pop %v356
    %v358 = vmul.f32 1.0, %v357
    %v359 = vtanh.pop %v352
    %v360 = vmul.f32 %v358, 0.0
    %362 = vrot.lane.b32.xlu0 %v359, 64
    %v363 = vpop.permute.xlu0 %362
    %v365 = vmul.f32 %v358, %v363
    %367 = vrot.lane.b32.xlu0 %v365, 32
    %v368 = vpop.permute.xlu0 %367
    %v370 = vadd.f32 %v360, %v368
    %v371 = vtanh.pop %v370
    %373 = vrot.lane.b32.xlu0 %v371, 64
    %v374 = vpop.permute.xlu0 %373
    %v376 = vmul.f32 %v358, %v374
    %v377 = vpack.c.bf16 %v376, %v376
    %v380 = vunpack.c.l.s4 1966171168
    %v381 = vunpack.c.0.s8 %v380
    %v382 = vlaneseq
    %v383 = vshrl.u32 %v382, 7
    %v384 = vsub.s32 %v381, %v383
    %v385 = vrot.slane %v377, %v384
    %v387 = vunpack.c.l.s4 1966171168
    %v388 = vunpack.c.0.s8 %v387
    %v389 = vlaneseq
    %v390 = vshrl.u32 %v389, 7
    %v391 = vsub.s32 %v388, %v390
    %v392 = vrot.slane %v385, %v391
    %393 = vrot.lane.b32.xlu0 %v392, 32
    %v394 = vpop.permute.xlu0 %393
    %vm396 = vcmask 253952
    %397 = vst.msk [vmem:[#allocation3] sm:$0x1] %vm396, %v394
    %s398 = scalar_lea.vmem [#allocation2], 2
    %v399 = vld [vmem:[%s398] sm:$0x3]
    %400 = vrot.lane.b32.xlu0 %v377, 32
    %v401 = vpop.permute.xlu0 %400
    %v403 = vsel %vm308, %v401, 0
    %405 = vmatprep.subr.bf16.mxu0 0
    %406 = vmatpush1.bf16.msra.mxu0 %v304
    %407 = vmatprep.subr.bf16.mxu0 0
    %408 = vmatpush1.bf16.msra.mxu0 %v305
    %409 = vmatprep.subr.bf16.mxu0 0
    %410 = vmatpush1.bf16.msra.mxu0 0
    %411 = vmatprep.subr.bf16.mxu0 0
    %412 = vmatpush1.bf16.msra.mxu0 0
    %413 = vmatprep.subr.bf16.mxu0 0
    %414 = vmatpush1.bf16.msra.mxu0 0
    %415 = vmatprep.subr.bf16.mxu0 0
    %416 = vmatpush1.bf16.msra.mxu0 0
    %417 = vmatprep.subr.bf16.mxu0 0
    %418 = vmatpush1.bf16.msra.mxu0 0
    %419 = vmatprep.subr.bf16.mxu0 0
    %420 = vmatpush1.bf16.msra.mxu0 0
    %421 = vmatprep.subr.bf16.mxu0 0
    %422 = vmatpush1.bf16.msra.mxu0 0
    %423 = vmatprep.subr.bf16.mxu0 0
    %424 = vmatpush1.bf16.msra.mxu0 0
    %425 = vmatprep.subr.bf16.mxu0 0
    %426 = vmatpush1.bf16.msra.mxu0 0
    %427 = vmatprep.subr.bf16.mxu0 0
    %428 = vmatpush1.bf16.msra.mxu0 0
    %429 = vmatprep.subr.bf16.mxu0 0
    %430 = vmatpush1.bf16.msra.mxu0 0
    %431 = vmatprep.subr.bf16.mxu0 0
    %432 = vmatpush1.bf16.msra.mxu0 0
    %433 = vmatprep.subr.bf16.mxu0 0
    %434 = vmatpush1.bf16.msra.mxu0 0
    %435 = vmatprep.subr.bf16.mxu0 0
    %436 = vmatpush1.bf16.msra.mxu0 0
    %437 = vmatprep.mubr.bf16.mxu0 0
    %438 = vmatmul.mubr.bf16.gmra.mrb[0].mxu0 %v403
    %v439 = vpop.f32.mrb[0].mxu0
    %v440 = vadd.f32 0.0, %v439
    %v441 = vpop.f32.mrb[0].mxu0
    %v442 = vpop.f32.mrb[0].mxu0
    %v443 = vpop.f32.mrb[0].mxu0
    %444 = vdwg.mxu0
    %v445 = vadd.f32 %v399, %v440
    %v446 = vxor.u32 %v445, 2147483648
    %v447 = vmul.f32 %v446, 1.442695
    %v448 = vpow.pop %v447
    %v449 = vadd.f32 %v448, 1.0
    %v450 = vrcp.pop %v449
    %v451 = vmul.f32 1.0, %v450
    %v452 = vtanh.pop %v445
    %v453 = vmul.f32 %v451, %v370
    %455 = vrot.lane.b32.xlu0 %v452, 64
    %v456 = vpop.permute.xlu0 %455
    %v458 = vmul.f32 %v451, %v456
    %460 = vrot.lane.b32.xlu0 %v458, 32
    %v461 = vpop.permute.xlu0 %460
    %v463 = vadd.f32 %v453, %v461
    %v464 = vtanh.pop %v463
    %466 = vrot.lane.b32.xlu0 %v464, 64
    %v467 = vpop.permute.xlu0 %466
    %v469 = vmul.f32 %v451, %v467
    %v470 = vpack.c.bf16 %v469, %v469
    %v473 = vunpack.c.l.s4 1966171168
    %v474 = vunpack.c.0.s8 %v473
    %v475 = vlaneseq
    %v476 = vshrl.u32 %v475, 7
    %v477 = vsub.s32 %v474, %v476
    %v478 = vrot.slane %v470, %v477
    %v480 = vunpack.c.l.s4 1966171168
    %v481 = vunpack.c.0.s8 %v480
    %v482 = vlaneseq
    %v483 = vshrl.u32 %v482, 7
    %v484 = vsub.s32 %v481, %v483
    %v485 = vrot.slane %v478, %v484
    %486 = vrot.lane.b32.xlu0 %v485, 32
    %v487 = vpop.permute.xlu0 %486
    %s489 = scalar_lea.vmem [#allocation3], 1
    %490 = vst.msk [vmem:[%s489] sm:$0x1] %vm396, %v487
    %s491 = scalar_lea.vmem [#allocation2], 4
    %v492 = vld [vmem:[%s491] sm:$0x3]
    %493 = vrot.lane.b32.xlu0 %v470, 32
    %v494 = vpop.permute.xlu0 %493
    %v496 = vsel %vm308, %v494, 0
    %498 = vmatprep.subr.bf16.mxu0 0
    %499 = vmatpush1.bf16.msra.mxu0 %v304
    %500 = vmatprep.subr.bf16.mxu0 0
    %501 = vmatpush1.bf16.msra.mxu0 %v305
    %502 = vmatprep.subr.bf16.mxu0 0
    %503 = vmatpush1.bf16.msra.mxu0 0
    %504 = vmatprep.subr.bf16.mxu0 0
    %505 = vmatpush1.bf16.msra.mxu0 0
    %506 = vmatprep.subr.bf16.mxu0 0
    %507 = vmatpush1.bf16.msra.mxu0 0
    %508 = vmatprep.subr.bf16.mxu0 0
    %509 = vmatpush1.bf16.msra.mxu0 0
    %510 = vmatprep.subr.bf16.mxu0 0
    %511 = vmatpush1.bf16.msra.mxu0 0
    %512 = vmatprep.subr.bf16.mxu0 0
    %513 = vmatpush1.bf16.msra.mxu0 0
    %514 = vmatprep.subr.bf16.mxu0 0
    %515 = vmatpush1.bf16.msra.mxu0 0
    %516 = vmatprep.subr.bf16.mxu0 0
    %517 = vmatpush1.bf16.msra.mxu0 0
    %518 = vmatprep.subr.bf16.mxu0 0
    %519 = vmatpush1.bf16.msra.mxu0 0
    %520 = vmatprep.subr.bf16.mxu0 0
    %521 = vmatpush1.bf16.msra.mxu0 0
    %522 = vmatprep.subr.bf16.mxu0 0
    %523 = vmatpush1.bf16.msra.mxu0 0
    %524 = vmatprep.subr.bf16.mxu0 0
    %525 = vmatpush1.bf16.msra.mxu0 0
    %526 = vmatprep.subr.bf16.mxu0 0
    %527 = vmatpush1.bf16.msra.mxu0 0
    %528 = vmatprep.subr.bf16.mxu0 0
    %529 = vmatpush1.bf16.msra.mxu0 0
    %530 = vmatprep.mubr.bf16.mxu0 0
    %531 = vmatmul.mubr.bf16.gmra.mrb[0].mxu0 %v496
    %v532 = vpop.f32.mrb[0].mxu0
    %v533 = vadd.f32 0.0, %v532
    %v534 = vpop.f32.mrb[0].mxu0
    %v535 = vpop.f32.mrb[0].mxu0
    %v536 = vpop.f32.mrb[0].mxu0
    %537 = vdwg.mxu0
    %v538 = vadd.f32 %v492, %v533
    %v539 = vxor.u32 %v538, 2147483648
    %v540 = vmul.f32 %v539, 1.442695
    %v541 = vpow.pop %v540
    %v542 = vadd.f32 %v541, 1.0
    %v543 = vrcp.pop %v542
    %v544 = vmul.f32 1.0, %v543
    %v545 = vtanh.pop %v538
    %v546 = vmul.f32 %v544, %v463
    %548 = vrot.lane.b32.xlu0 %v545, 64
    %v549 = vpop.permute.xlu0 %548
    %v551 = vmul.f32 %v544, %v549
    %553 = vrot.lane.b32.xlu0 %v551, 32
    %v554 = vpop.permute.xlu0 %553
    %v556 = vadd.f32 %v546, %v554
    %v557 = vtanh.pop %v556
    %559 = vrot.lane.b32.xlu0 %v557, 64
    %v560 = vpop.permute.xlu0 %559
    %v562 = vmul.f32 %v544, %v560
    %v563 = vpack.c.bf16 %v562, %v562
    %v566 = vunpack.c.l.s4 1966171168
    %v567 = vunpack.c.0.s8 %v566
    %v568 = vlaneseq
    %v569 = vshrl.u32 %v568, 7
    %v570 = vsub.s32 %v567, %v569
    %v571 = vrot.slane %v563, %v570
    %v573 = vunpack.c.l.s4 1966171168
    %v574 = vunpack.c.0.s8 %v573
    %v575 = vlaneseq
    %v576 = vshrl.u32 %v575, 7
    %v577 = vsub.s32 %v574, %v576
    %v578 = vrot.slane %v571, %v577
    %579 = vrot.lane.b32.xlu0 %v578, 32
    %v580 = vpop.permute.xlu0 %579
    %s582 = scalar_lea.vmem [#allocation3], 2
    %583 = vst.msk [vmem:[%s582] sm:$0x1] %vm396, %v580
    %s584 = scalar_lea.vmem [#allocation2], 6
    %v585 = vld [vmem:[%s584] sm:$0x3]
    %586 = vrot.lane.b32.xlu0 %v563, 32
    %v587 = vpop.permute.xlu0 %586
    %v589 = vsel %vm308, %v587, 0
    %591 = vmatprep.subr.bf16.mxu0 0
    %592 = vmatpush1.bf16.msra.mxu0 %v304
    %593 = vmatprep.subr.bf16.mxu0 0
    %594 = vmatpush1.bf16.msra.mxu0 %v305
    %595 = vmatprep.subr.bf16.mxu0 0
    %596 = vmatpush1.bf16.msra.mxu0 0
    %597 = vmatprep.subr.bf16.mxu0 0
    %598 = vmatpush1.bf16.msra.mxu0 0
    %599 = vmatprep.subr.bf16.mxu0 0
    %600 = vmatpush1.bf16.msra.mxu0 0
    %601 = vmatprep.subr.bf16.mxu0 0
    %602 = vmatpush1.bf16.msra.mxu0 0
    %603 = vmatprep.subr.bf16.mxu0 0
    %604 = vmatpush1.bf16.msra.mxu0 0
    %605 = vmatprep.subr.bf16.mxu0 0
    %606 = vmatpush1.bf16.msra.mxu0 0
    %607 = vmatprep.subr.bf16.mxu0 0
    %608 = vmatpush1.bf16.msra.mxu0 0
    %609 = vmatprep.subr.bf16.mxu0 0
    %610 = vmatpush1.bf16.msra.mxu0 0
    %611 = vmatprep.subr.bf16.mxu0 0
    %612 = vmatpush1.bf16.msra.mxu0 0
    %613 = vmatprep.subr.bf16.mxu0 0
    %614 = vmatpush1.bf16.msra.mxu0 0
    %615 = vmatprep.subr.bf16.mxu0 0
    %616 = vmatpush1.bf16.msra.mxu0 0
    %617 = vmatprep.subr.bf16.mxu0 0
    %618 = vmatpush1.bf16.msra.mxu0 0
    %619 = vmatprep.subr.bf16.mxu0 0
    %620 = vmatpush1.bf16.msra.mxu0 0
    %621 = vmatprep.subr.bf16.mxu0 0
    %622 = vmatpush1.bf16.msra.mxu0 0
    %623 = vmatprep.mubr.bf16.mxu0 0
    %624 = vmatmul.mubr.bf16.gmra.mrb[0].mxu0 %v589
    %v625 = vpop.f32.mrb[0].mxu0
    %v626 = vadd.f32 0.0, %v625
    %v627 = vpop.f32.mrb[0].mxu0
    %v628 = vpop.f32.mrb[0].mxu0
    %v629 = vpop.f32.mrb[0].mxu0
    %630 = vdwg.mxu0
    %v631 = vadd.f32 %v585, %v626
    %v632 = vxor.u32 %v631, 2147483648
    %v633 = vmul.f32 %v632, 1.442695
    %v634 = vpow.pop %v633
    %v635 = vadd.f32 %v634, 1.0
    %v636 = vrcp.pop %v635
    %v637 = vmul.f32 1.0, %v636
    %v638 = vtanh.pop %v631
    %v639 = vmul.f32 %v637, %v556
    %641 = vrot.lane.b32.xlu0 %v638, 64
    %v642 = vpop.permute.xlu0 %641
    %v644 = vmul.f32 %v637, %v642
    %646 = vrot.lane.b32.xlu0 %v644, 32
    %v647 = vpop.permute.xlu0 %646
    %v649 = vadd.f32 %v639, %v647
    %v650 = vtanh.pop %v649
    %652 = vrot.lane.b32.xlu0 %v650, 64
    %v653 = vpop.permute.xlu0 %652
    %v655 = vmul.f32 %v637, %v653
    %v656 = vpack.c.bf16 %v655, %v655
    %v659 = vunpack.c.l.s4 1966171168
    %v660 = vunpack.c.0.s8 %v659
    %v661 = vlaneseq
    %v662 = vshrl.u32 %v661, 7
    %v663 = vsub.s32 %v660, %v662
    %v664 = vrot.slane %v656, %v663
    %v666 = vunpack.c.l.s4 1966171168
    %v667 = vunpack.c.0.s8 %v666
    %v668 = vlaneseq
    %v669 = vshrl.u32 %v668, 7
    %v670 = vsub.s32 %v667, %v669
    %v671 = vrot.slane %v664, %v670
    %672 = vrot.lane.b32.xlu0 %v671, 32
    %v673 = vpop.permute.xlu0 %672
    %s675 = scalar_lea.vmem [#allocation3], 3
    %676 = vst.msk [vmem:[%s675] sm:$0x1] %vm396, %v673
    %s677 = scalar_lea.vmem [#allocation2], 8
    %v678 = vld [vmem:[%s677] sm:$0x3]
    %679 = vrot.lane.b32.xlu0 %v656, 32
    %v680 = vpop.permute.xlu0 %679
    %v682 = vsel %vm308, %v680, 0
    %684 = vmatprep.subr.bf16.mxu0 0
    %685 = vmatpush1.bf16.msra.mxu0 %v304
    %686 = vmatprep.subr.bf16.mxu0 0
    %687 = vmatpush1.bf16.msra.mxu0 %v305
    %688 = vmatprep.subr.bf16.mxu0 0
    %689 = vmatpush1.bf16.msra.mxu0 0
    %690 = vmatprep.subr.bf16.mxu0 0
    %691 = vmatpush1.bf16.msra.mxu0 0
    %692 = vmatprep.subr.bf16.mxu0 0
    %693 = vmatpush1.bf16.msra.mxu0 0
    %694 = vmatprep.subr.bf16.mxu0 0
    %695 = vmatpush1.bf16.msra.mxu0 0
    %696 = vmatprep.subr.bf16.mxu0 0
    %697 = vmatpush1.bf16.msra.mxu0 0
    %698 = vmatprep.subr.bf16.mxu0 0
    %699 = vmatpush1.bf16.msra.mxu0 0
    %700 = vmatprep.subr.bf16.mxu0 0
    %701 = vmatpush1.bf16.msra.mxu0 0
    %702 = vmatprep.subr.bf16.mxu0 0
    %703 = vmatpush1.bf16.msra.mxu0 0
    %704 = vmatprep.subr.bf16.mxu0 0
    %705 = vmatpush1.bf16.msra.mxu0 0
    %706 = vmatprep.subr.bf16.mxu0 0
    %707 = vmatpush1.bf16.msra.mxu0 0
    %708 = vmatprep.subr.bf16.mxu0 0
    %709 = vmatpush1.bf16.msra.mxu0 0
    %710 = vmatprep.subr.bf16.mxu0 0
    %711 = vmatpush1.bf16.msra.mxu0 0
    %712 = vmatprep.subr.bf16.mxu0 0
    %713 = vmatpush1.bf16.msra.mxu0 0
    %714 = vmatprep.subr.bf16.mxu0 0
    %715 = vmatpush1.bf16.msra.mxu0 0
    %716 = vmatprep.mubr.bf16.mxu0 0
    %717 = vmatmul.mubr.bf16.gmra.mrb[0].mxu0 %v682
    %v718 = vpop.f32.mrb[0].mxu0
    %v719 = vadd.f32 0.0, %v718
    %v720 = vpop.f32.mrb[0].mxu0
    %v721 = vpop.f32.mrb[0].mxu0
    %v722 = vpop.f32.mrb[0].mxu0
    %723 = vdwg.mxu0
    %v724 = vadd.f32 %v678, %v719
    %v725 = vxor.u32 %v724, 2147483648
    %v726 = vmul.f32 %v725, 1.442695
    %v727 = vpow.pop %v726
    %v728 = vadd.f32 %v727, 1.0
    %v729 = vrcp.pop %v728
    %v730 = vmul.f32 1.0, %v729
    %v731 = vtanh.pop %v724
    %v732 = vmul.f32 %v730, %v649
    %734 = vrot.lane.b32.xlu0 %v731, 64
    %v735 = vpop.permute.xlu0 %734
    %v737 = vmul.f32 %v730, %v735
    %739 = vrot.lane.b32.xlu0 %v737, 32
    %v740 = vpop.permute.xlu0 %739
    %v742 = vadd.f32 %v732, %v740
    %v743 = vtanh.pop %v742
    %745 = vrot.lane.b32.xlu0 %v743, 64
    %v746 = vpop.permute.xlu0 %745
    %v748 = vmul.f32 %v730, %v746
    %v749 = vpack.c.bf16 %v748, %v748
    %v752 = vunpack.c.l.s4 1966171168
    %v753 = vunpack.c.0.s8 %v752
    %v754 = vlaneseq
    %v755 = vshrl.u32 %v754, 7
    %v756 = vsub.s32 %v753, %v755
    %v757 = vrot.slane %v749, %v756
    %v759 = vunpack.c.l.s4 1966171168
    %v760 = vunpack.c.0.s8 %v759
    %v761 = vlaneseq
    %v762 = vshrl.u32 %v761, 7
    %v763 = vsub.s32 %v760, %v762
    %v764 = vrot.slane %v757, %v763
    %765 = vrot.lane.b32.xlu0 %v764, 32
    %v766 = vpop.permute.xlu0 %765
    %s768 = scalar_lea.vmem [#allocation3], 4
    %769 = vst.msk [vmem:[%s768] sm:$0x1] %vm396, %v766
    %s770 = scalar_lea.vmem [#allocation2], 10
    %v771 = vld [vmem:[%s770] sm:$0x3]
    %772 = vrot.lane.b32.xlu0 %v749, 32
    %v773 = vpop.permute.xlu0 %772
    %v775 = vsel %vm308, %v773, 0
    %777 = vmatprep.subr.bf16.mxu0 0
    %778 = vmatpush1.bf16.msra.mxu0 %v304
    %779 = vmatprep.subr.bf16.mxu0 0
    %780 = vmatpush1.bf16.msra.mxu0 %v305
    %781 = vmatprep.subr.bf16.mxu0 0
    %782 = vmatpush1.bf16.msra.mxu0 0
    %783 = vmatprep.subr.bf16.mxu0 0
    %784 = vmatpush1.bf16.msra.mxu0 0
    %785 = vmatprep.subr.bf16.mxu0 0
    %786 = vmatpush1.bf16.msra.mxu0 0
    %787 = vmatprep.subr.bf16.mxu0 0
    %788 = vmatpush1.bf16.msra.mxu0 0
    %789 = vmatprep.subr.bf16.mxu0 0
    %790 = vmatpush1.bf16.msra.mxu0 0
    %791 = vmatprep.subr.bf16.mxu0 0
    %792 = vmatpush1.bf16.msra.mxu0 0
    %793 = vmatprep.subr.bf16.mxu0 0
    %794 = vmatpush1.bf16.msra.mxu0 0
    %795 = vmatprep.subr.bf16.mxu0 0
    %796 = vmatpush1.bf16.msra.mxu0 0
    %797 = vmatprep.subr.bf16.mxu0 0
    %798 = vmatpush1.bf16.msra.mxu0 0
    %799 = vmatprep.subr.bf16.mxu0 0
    %800 = vmatpush1.bf16.msra.mxu0 0
    %801 = vmatprep.subr.bf16.mxu0 0
    %802 = vmatpush1.bf16.msra.mxu0 0
    %803 = vmatprep.subr.bf16.mxu0 0
    %804 = vmatpush1.bf16.msra.mxu0 0
    %805 = vmatprep.subr.bf16.mxu0 0
    %806 = vmatpush1.bf16.msra.mxu0 0
    %807 = vmatprep.subr.bf16.mxu0 0
    %808 = vmatpush1.bf16.msra.mxu0 0
    %809 = vmatprep.mubr.bf16.mxu0 0
    %810 = vmatmul.mubr.bf16.gmra.mrb[0].mxu0 %v775
    %v811 = vpop.f32.mrb[0].mxu0
    %v812 = vadd.f32 0.0, %v811
    %v813 = vpop.f32.mrb[0].mxu0
    %v814 = vpop.f32.mrb[0].mxu0
    %v815 = vpop.f32.mrb[0].mxu0
    %816 = vdwg.mxu0
    %v817 = vadd.f32 %v771, %v812
    %v818 = vxor.u32 %v817, 2147483648
    %v819 = vmul.f32 %v818, 1.442695
    %v820 = vpow.pop %v819
    %v821 = vadd.f32 %v820, 1.0
    %v822 = vrcp.pop %v821
    %v823 = vmul.f32 1.0, %v822
    %v824 = vtanh.pop %v817
    %v825 = vmul.f32 %v823, %v742
    %827 = vrot.lane.b32.xlu0 %v824, 64
    %v828 = vpop.permute.xlu0 %827
    %v830 = vmul.f32 %v823, %v828
    %832 = vrot.lane.b32.xlu0 %v830, 32
    %v833 = vpop.permute.xlu0 %832
    %v835 = vadd.f32 %v825, %v833
    %v836 = vtanh.pop %v835
    %838 = vrot.lane.b32.xlu0 %v836, 64
    %v839 = vpop.permute.xlu0 %838
    %v841 = vmul.f32 %v823, %v839
    %v842 = vpack.c.bf16 %v841, %v841
    %v845 = vunpack.c.l.s4 1966171168
    %v846 = vunpack.c.0.s8 %v845
    %v847 = vlaneseq
    %v848 = vshrl.u32 %v847, 7
    %v849 = vsub.s32 %v846, %v848
    %v850 = vrot.slane %v842, %v849
    %v852 = vunpack.c.l.s4 1966171168
    %v853 = vunpack.c.0.s8 %v852
    %v854 = vlaneseq
    %v855 = vshrl.u32 %v854, 7
    %v856 = vsub.s32 %v853, %v855
    %v857 = vrot.slane %v850, %v856
    %858 = vrot.lane.b32.xlu0 %v857, 32
    %v859 = vpop.permute.xlu0 %858
    %s861 = scalar_lea.vmem [#allocation3], 5
    %862 = vst.msk [vmem:[%s861] sm:$0x1] %vm396, %v859
    %s863 = scalar_lea.vmem [#allocation2], 12
    %v864 = vld [vmem:[%s863] sm:$0x3]
    %865 = vrot.lane.b32.xlu0 %v842, 32
    %v866 = vpop.permute.xlu0 %865
    %v868 = vsel %vm308, %v866, 0
    %870 = vmatprep.subr.bf16.mxu0 0
    %871 = vmatpush1.bf16.msra.mxu0 %v304
    %872 = vmatprep.subr.bf16.mxu0 0
    %873 = vmatpush1.bf16.msra.mxu0 %v305
    %874 = vmatprep.subr.bf16.mxu0 0
    %875 = vmatpush1.bf16.msra.mxu0 0
    %876 = vmatprep.subr.bf16.mxu0 0
    %877 = vmatpush1.bf16.msra.mxu0 0
    %878 = vmatprep.subr.bf16.mxu0 0
    %879 = vmatpush1.bf16.msra.mxu0 0
    %880 = vmatprep.subr.bf16.mxu0 0
    %881 = vmatpush1.bf16.msra.mxu0 0
    %882 = vmatprep.subr.bf16.mxu0 0
    %883 = vmatpush1.bf16.msra.mxu0 0
    %884 = vmatprep.subr.bf16.mxu0 0
    %885 = vmatpush1.bf16.msra.mxu0 0
    %886 = vmatprep.subr.bf16.mxu0 0
    %887 = vmatpush1.bf16.msra.mxu0 0
    %888 = vmatprep.subr.bf16.mxu0 0
    %889 = vmatpush1.bf16.msra.mxu0 0
    %890 = vmatprep.subr.bf16.mxu0 0
    %891 = vmatpush1.bf16.msra.mxu0 0
    %892 = vmatprep.subr.bf16.mxu0 0
    %893 = vmatpush1.bf16.msra.mxu0 0
    %894 = vmatprep.subr.bf16.mxu0 0
    %895 = vmatpush1.bf16.msra.mxu0 0
    %896 = vmatprep.subr.bf16.mxu0 0
    %897 = vmatpush1.bf16.msra.mxu0 0
    %898 = vmatprep.subr.bf16.mxu0 0
    %899 = vmatpush1.bf16.msra.mxu0 0
    %900 = vmatprep.subr.bf16.mxu0 0
    %901 = vmatpush1.bf16.msra.mxu0 0
    %902 = vmatprep.mubr.bf16.mxu0 0
    %903 = vmatmul.mubr.bf16.gmra.mrb[0].mxu0 %v868
    %v904 = vpop.f32.mrb[0].mxu0
    %v905 = vadd.f32 0.0, %v904
    %v906 = vpop.f32.mrb[0].mxu0
    %v907 = vpop.f32.mrb[0].mxu0
    %v908 = vpop.f32.mrb[0].mxu0
    %909 = vdwg.mxu0
    %v910 = vadd.f32 %v864, %v905
    %v911 = vxor.u32 %v910, 2147483648
    %v912 = vmul.f32 %v911, 1.442695
    %v913 = vpow.pop %v912
    %v914 = vadd.f32 %v913, 1.0
    %v915 = vrcp.pop %v914
    %v916 = vmul.f32 1.0, %v915
    %v917 = vtanh.pop %v910
    %v918 = vmul.f32 %v916, %v835
    %920 = vrot.lane.b32.xlu0 %v917, 64
    %v921 = vpop.permute.xlu0 %920
    %v923 = vmul.f32 %v916, %v921
    %925 = vrot.lane.b32.xlu0 %v923, 32
    %v926 = vpop.permute.xlu0 %925
    %v928 = vadd.f32 %v918, %v926
    %v929 = vtanh.pop %v928
    %931 = vrot.lane.b32.xlu0 %v929, 64
    %v932 = vpop.permute.xlu0 %931
    %v934 = vmul.f32 %v916, %v932
    %v935 = vpack.c.bf16 %v934, %v934
    %v938 = vunpack.c.l.s4 1966171168
    %v939 = vunpack.c.0.s8 %v938
    %v940 = vlaneseq
    %v941 = vshrl.u32 %v940, 7
    %v942 = vsub.s32 %v939, %v941
    %v943 = vrot.slane %v935, %v942
    %v945 = vunpack.c.l.s4 1966171168
    %v946 = vunpack.c.0.s8 %v945
    %v947 = vlaneseq
    %v948 = vshrl.u32 %v947, 7
    %v949 = vsub.s32 %v946, %v948
    %v950 = vrot.slane %v943, %v949
    %951 = vrot.lane.b32.xlu0 %v950, 32
    %v952 = vpop.permute.xlu0 %951
    %s954 = scalar_lea.vmem [#allocation3], 6
    %955 = vst.msk [vmem:[%s954] sm:$0x1] %vm396, %v952
    %s956 = scalar_lea.vmem [#allocation2], 14
    %v957 = vld [vmem:[%s956] sm:$0x3]
    %958 = vrot.lane.b32.xlu0 %v935, 32
    %v959 = vpop.permute.xlu0 %958
    %v961 = vsel %vm308, %v959, 0
    %963 = vmatprep.subr.bf16.mxu0 0
    %964 = vmatpush1.bf16.msra.mxu0 %v304
    %965 = vmatprep.subr.bf16.mxu0 0
    %966 = vmatpush1.bf16.msra.mxu0 %v305
    %967 = vmatprep.subr.bf16.mxu0 0
    %968 = vmatpush1.bf16.msra.mxu0 0
    %969 = vmatprep.subr.bf16.mxu0 0
    %970 = vmatpush1.bf16.msra.mxu0 0
    %971 = vmatprep.subr.bf16.mxu0 0
    %972 = vmatpush1.bf16.msra.mxu0 0
    %973 = vmatprep.subr.bf16.mxu0 0
    %974 = vmatpush1.bf16.msra.mxu0 0
    %975 = vmatprep.subr.bf16.mxu0 0
    %976 = vmatpush1.bf16.msra.mxu0 0
    %977 = vmatprep.subr.bf16.mxu0 0
    %978 = vmatpush1.bf16.msra.mxu0 0
    %979 = vmatprep.subr.bf16.mxu0 0
    %980 = vmatpush1.bf16.msra.mxu0 0
    %981 = vmatprep.subr.bf16.mxu0 0
    %982 = vmatpush1.bf16.msra.mxu0 0
    %983 = vmatprep.subr.bf16.mxu0 0
    %984 = vmatpush1.bf16.msra.mxu0 0
    %985 = vmatprep.subr.bf16.mxu0 0
    %986 = vmatpush1.bf16.msra.mxu0 0
    %987 = vmatprep.subr.bf16.mxu0 0
    %988 = vmatpush1.bf16.msra.mxu0 0
    %989 = vmatprep.subr.bf16.mxu0 0
    %990 = vmatpush1.bf16.msra.mxu0 0
    %991 = vmatprep.subr.bf16.mxu0 0
    %992 = vmatpush1.bf16.msra.mxu0 0
    %993 = vmatprep.subr.bf16.mxu0 0
    %994 = vmatpush1.bf16.msra.mxu0 0
    %995 = vmatprep.mubr.bf16.mxu0 0
    %996 = vmatmul.mubr.bf16.gmra.mrb[0].mxu0 %v961
    %v997 = vpop.f32.mrb[0].mxu0
    %v998 = vadd.f32 0.0, %v997
    %v999 = vpop.f32.mrb[0].mxu0
    %v1000 = vpop.f32.mrb[0].mxu0
    %v1001 = vpop.f32.mrb[0].mxu0
    %1002 = vdwg.mxu0
    %v1003 = vadd.f32 %v957, %v998
    %v1004 = vxor.u32 %v1003, 2147483648
    %v1005 = vmul.f32 %v1004, 1.442695
    %v1006 = vpow.pop %v1005
    %v1007 = vadd.f32 %v1006, 1.0
    %v1008 = vrcp.pop %v1007
    %v1009 = vmul.f32 1.0, %v1008
    %v1010 = vtanh.pop %v1003
    %v1011 = vmul.f32 %v1009, %v928
    %1013 = vrot.lane.b32.xlu0 %v1010, 64
    %v1014 = vpop.permute.xlu0 %1013
    %v1016 = vmul.f32 %v1009, %v1014
    %1018 = vrot.lane.b32.xlu0 %v1016, 32
    %v1019 = vpop.permute.xlu0 %1018
    %v1021 = vadd.f32 %v1011, %v1019
    %v1022 = vtanh.pop %v1021
    %1024 = vrot.lane.b32.xlu0 %v1022, 64
    %v1025 = vpop.permute.xlu0 %1024
    %v1027 = vmul.f32 %v1009, %v1025
    %v1028 = vpack.c.bf16 %v1027, %v1027
    %v1031 = vunpack.c.l.s4 1966171168
    %v1032 = vunpack.c.0.s8 %v1031
    %v1033 = vlaneseq
    %v1034 = vshrl.u32 %v1033, 7
    %v1035 = vsub.s32 %v1032, %v1034
    %v1036 = vrot.slane %v1028, %v1035
    %v1038 = vunpack.c.l.s4 1966171168
    %v1039 = vunpack.c.0.s8 %v1038
    %v1040 = vlaneseq
    %v1041 = vshrl.u32 %v1040, 7
    %v1042 = vsub.s32 %v1039, %v1041
    %v1043 = vrot.slane %v1036, %v1042
    %1044 = vrot.lane.b32.xlu0 %v1043, 32
    %v1045 = vpop.permute.xlu0 %1044
    %s1047 = scalar_lea.vmem [#allocation3], 7
    %1048 = vst.msk [vmem:[%s1047] sm:$0x1] %vm396, %v1045
    %v1049 = vld [vmem:[#allocation3] sm:$0x1]
    %v1050 = vld [vmem:[#allocation3 + $0x1] sm:$0x1]
    %v1051 = vld [vmem:[#allocation3 + $0x2] sm:$0x1]
    %v1052 = vld [vmem:[#allocation3 + $0x3] sm:$0x1]
    %v1053 = vld [vmem:[#allocation3 + $0x4] sm:$0x1]
    %v1054 = vld [vmem:[#allocation3 + $0x5] sm:$0x1]
    %v1055 = vld [vmem:[#allocation3 + $0x6] sm:$0x1]
    %v1056 = vld [vmem:[#allocation3 + $0x7] sm:$0x1]
    %v1057 = vld [vmem:[%s6] sm:$0xf]
    %v1058 = vld [vmem:[%s6 + $0x4] sm:$0xf]
    %v1059 = vld [vmem:[%s6 + $0x8] sm:$0xf]
    %v1060 = vld [vmem:[%s6 + $0xc] sm:$0xf]
    %v1061 = vld [vmem:[%s7] sm:$0x1]
    %v1063 = vlaneseq
    %v1064 = vshrl.u32 %v1063, 7
    %v1065 = vsub.s32 0, %v1064
    %v1066 = vrot.slane %v1061, %v1065
    %v1076 = vcombine.low %v1049, %v1050
    %v1077 = vcombine.low %v1051, %v1052
    %v1078 = vcombine.low %v1053, %v1054
    %v1079 = vcombine.low %v1055, %v1056
    %v1081 = vunpack.c.l.s4 1966171168
    %v1082 = vunpack.c.0.s8 %v1081
    %v1083 = vlaneseq
    %v1084 = vshrl.u32 %v1083, 7
    %v1085 = vsub.s32 %v1082, %v1084
    %v1086 = vrot.slane %v1076, %v1085
    %v1088 = vunpack.c.l.s4 1966171168
    %v1089 = vunpack.c.0.s8 %v1088
    %v1090 = vlaneseq
    %v1091 = vshrl.u32 %v1090, 7
    %v1092 = vsub.s32 %v1089, %v1091
    %v1093 = vrot.slane %v1077, %v1092
    %v1095 = vunpack.c.l.s4 1966171168
    %v1096 = vunpack.c.0.s8 %v1095
    %v1097 = vlaneseq
    %v1098 = vshrl.u32 %v1097, 7
    %v1099 = vsub.s32 %v1096, %v1098
    %v1100 = vrot.slane %v1078, %v1099
    %v1102 = vunpack.c.l.s4 1966171168
    %v1103 = vunpack.c.0.s8 %v1102
    %v1104 = vlaneseq
    %v1105 = vshrl.u32 %v1104, 7
    %v1106 = vsub.s32 %v1103, %v1105
    %v1107 = vrot.slane %v1079, %v1106
    %v1108 = vcombine.low %v1086, %v1093
    %v1109 = vcombine.low %v1100, %v1107
    %v1111 = vunpack.c.l.s4 1966171168
    %v1112 = vunpack.c.0.s8 %v1111
    %v1113 = vlaneseq
    %v1114 = vshrl.u32 %v1113, 7
    %v1115 = vsub.s32 %v1112, %v1114
    %v1116 = vrot.slane %v1108, %v1115
    %v1118 = vunpack.c.l.s4 1966171168
    %v1119 = vunpack.c.0.s8 %v1118
    %v1120 = vlaneseq
    %v1121 = vshrl.u32 %v1120, 7
    %v1122 = vsub.s32 %v1119, %v1121
    %v1123 = vrot.slane %v1109, %v1122
    %v1124 = vcombine.low %v1116, %v1123
    %v1129 = vunpack.c.l.b16 %v1057
    %v1130 = vunpack.c.l.b16 %v1058
    %v1131 = vunpack.c.l.b16 %v1059
    %v1132 = vunpack.c.l.b16 %v1060
    %v1133 = vpack.c.b16 %v1130, %v1129
    %v1134 = vpack.c.b16 %v1132, %v1131
    %v1138 = vsel %vm308, %v1124, 0
    %1140 = vmatprep.subr.bf16.mxu0 0
    %1141 = vmatpush1.bf16.msra.mxu0 %v1133
    %1142 = vmatprep.subr.bf16.mxu0 0
    %1143 = vmatpush1.bf16.msra.mxu0 %v1134
    %1144 = vmatprep.subr.bf16.mxu0 0
    %1145 = vmatpush1.bf16.msra.mxu0 0
    %1146 = vmatprep.subr.bf16.mxu0 0
    %1147 = vmatpush1.bf16.msra.mxu0 0
    %1148 = vmatprep.subr.bf16.mxu0 0
    %1149 = vmatpush1.bf16.msra.mxu0 0
    %1150 = vmatprep.subr.bf16.mxu0 0
    %1151 = vmatpush1.bf16.msra.mxu0 0
    %1152 = vmatprep.subr.bf16.mxu0 0
    %1153 = vmatpush1.bf16.msra.mxu0 0
    %1154 = vmatprep.subr.bf16.mxu0 0
    %1155 = vmatpush1.bf16.msra.mxu0 0
    %1156 = vmatprep.subr.bf16.mxu0 0
    %1157 = vmatpush1.bf16.msra.mxu0 0
    %1158 = vmatprep.subr.bf16.mxu0 0
    %1159 = vmatpush1.bf16.msra.mxu0 0
    %1160 = vmatprep.subr.bf16.mxu0 0
    %1161 = vmatpush1.bf16.msra.mxu0 0
    %1162 = vmatprep.subr.bf16.mxu0 0
    %1163 = vmatpush1.bf16.msra.mxu0 0
    %1164 = vmatprep.subr.bf16.mxu0 0
    %1165 = vmatpush1.bf16.msra.mxu0 0
    %1166 = vmatprep.subr.bf16.mxu0 0
    %1167 = vmatpush1.bf16.msra.mxu0 0
    %1168 = vmatprep.subr.bf16.mxu0 0
    %1169 = vmatpush1.bf16.msra.mxu0 0
    %1170 = vmatprep.subr.bf16.mxu0 0
    %1171 = vmatpush1.bf16.msra.mxu0 0
    %1172 = vmatprep.mubr.bf16.mxu0 0
    %1173 = vmatmul.mubr.bf16.gmra.mrb[0].mxu0 %v1138
    %v1174 = vpop.f32.mrb[0].mxu0
    %v1175 = vadd.f32 %v1066, %v1174
    %v1176 = vpop.f32.mrb[0].mxu0
    %v1177 = vpop.f32.mrb[0].mxu0
    %v1178 = vadd.f32 %v1066, %v1177
    %v1179 = vpop.f32.mrb[0].mxu0
    %1180 = vdwg.mxu0
    %v1181 = vtanh.pop %v1175
    %v1182 = vtanh.pop %v1178
    %v1183 = vld [vmem:[%s8] sm:$0x1]
    %v1185 = vlaneseq
    %v1186 = vshrl.u32 %v1185, 7
    %v1187 = vsub.s32 0, %v1186
    %v1188 = vrot.slane %v1183, %v1187
    %v1190 = vmul.f32 %v1181, %v1188
    %v1191 = vmul.f32 %v1182, %v1188
    %v1192 = vsel %vm194, %v1190, 0.0
    %1193 = vadd.xlane.f32.xlu0 %v1192
    %v1194 = vpop.xlane.xlu0 %1193
    %v1195 = vsel %vm194, %v1191, 0.0
    %1196 = vadd.xlane.f32.xlu0 %v1195
    %v1197 = vpop.xlane.xlu0 %1196
    %v1201 = vunpack.c.l.s4 269488144
    %v1202 = vunpack.c.0.s8 %v1201
    %v1203 = vlaneseq
    %v1204 = vshrl.u32 %v1203, 7
    %v1205 = vsub.s32 %v1202, %v1204
    %v1206 = vrot.slane %v1194, %v1205
    %v1208 = vunpack.c.l.s4 842150450
    %v1209 = vunpack.c.0.s8 %v1208
    %v1210 = vlaneseq
    %v1211 = vshrl.u32 %v1210, 7
    %v1212 = vsub.s32 %v1209, %v1211
    %v1213 = vrot.slane %v1194, %v1212
    %v1215 = vunpack.c.l.s4 1414812756
    %v1216 = vunpack.c.0.s8 %v1215
    %v1217 = vlaneseq
    %v1218 = vshrl.u32 %v1217, 7
    %v1219 = vsub.s32 %v1216, %v1218
    %v1220 = vrot.slane %v1194, %v1219
    %v1222 = vunpack.c.l.s4 1987475062
    %v1223 = vunpack.c.0.s8 %v1222
    %v1224 = vlaneseq
    %v1225 = vshrl.u32 %v1224, 7
    %v1226 = vsub.s32 %v1223, %v1225
    %v1227 = vrot.slane %v1194, %v1226
    %v1229 = vunpack.c.l.s4 269488144
    %v1230 = vunpack.c.0.s8 %v1229
    %v1231 = vlaneseq
    %v1232 = vshrl.u32 %v1231, 7
    %v1233 = vsub.s32 %v1230, %v1232
    %v1234 = vrot.slane %v1197, %v1233
    %v1236 = vunpack.c.l.s4 842150450
    %v1237 = vunpack.c.0.s8 %v1236
    %v1238 = vlaneseq
    %v1239 = vshrl.u32 %v1238, 7
    %v1240 = vsub.s32 %v1237, %v1239
    %v1241 = vrot.slane %v1197, %v1240
    %v1243 = vunpack.c.l.s4 1414812756
    %v1244 = vunpack.c.0.s8 %v1243
    %v1245 = vlaneseq
    %v1246 = vshrl.u32 %v1245, 7
    %v1247 = vsub.s32 %v1244, %v1246
    %v1248 = vrot.slane %v1197, %v1247
    %v1250 = vunpack.c.l.s4 1987475062
    %v1251 = vunpack.c.0.s8 %v1250
    %v1252 = vlaneseq
    %v1253 = vshrl.u32 %v1252, 7
    %v1254 = vsub.s32 %v1251, %v1253
    %v1255 = vrot.slane %v1197, %v1254
    %v1264 = vmax.f32 %v1206, %v1234
    %v1265 = vmax.f32 %v1213, %v1241
    %v1266 = vmax.f32 %v1220, %v1248
    %v1267 = vmax.f32 %v1227, %v1255
    %v1268 = vmax.f32 %v1264, %v1265
    %v1269 = vmax.f32 %v1266, %v1267
    %v1270 = vmax.f32 %v1268, %v1269
    %v1271 = vsub.f32 %v1206, %v1270
    %v1272 = vsub.f32 %v1213, %v1270
    %v1273 = vsub.f32 %v1220, %v1270
    %v1274 = vsub.f32 %v1227, %v1270
    %v1275 = vsub.f32 %v1234, %v1270
    %v1276 = vsub.f32 %v1241, %v1270
    %v1277 = vsub.f32 %v1248, %v1270
    %v1278 = vsub.f32 %v1255, %v1270
    %v1279 = vmul.f32 %v1271, 1.442695
    %v1280 = vpow.pop %v1279
    %v1281 = vmul.f32 %v1272, 1.442695
    %v1282 = vpow.pop %v1281
    %v1283 = vmul.f32 %v1273, 1.442695
    %v1284 = vpow.pop %v1283
    %v1285 = vmul.f32 %v1274, 1.442695
    %v1286 = vpow.pop %v1285
    %v1287 = vmul.f32 %v1275, 1.442695
    %v1288 = vpow.pop %v1287
    %v1289 = vmul.f32 %v1276, 1.442695
    %v1290 = vpow.pop %v1289
    %v1291 = vmul.f32 %v1277, 1.442695
    %v1292 = vpow.pop %v1291
    %v1293 = vmul.f32 %v1278, 1.442695
    %v1294 = vpow.pop %v1293
    %vm1295 = vcmask 1041408
    %v1296 = vsel %vm1295, %v1280, 0.0
    %v1297 = vsel %vm1295, %v1282, 0.0
    %v1298 = vadd.f32 %v1296, %v1297
    %v1299 = vsel %vm1295, %v1284, 0.0
    %v1300 = vadd.f32 %v1298, %v1299
    %v1301 = vsel %vm1295, %v1286, 0.0
    %v1302 = vadd.f32 %v1300, %v1301
    %v1303 = vsel %vm1295, %v1288, 0.0
    %v1304 = vadd.f32 %v1302, %v1303
    %v1305 = vsel %vm1295, %v1290, 0.0
    %v1306 = vadd.f32 %v1304, %v1305
    %v1307 = vsel %vm1295, %v1292, 0.0
    %v1308 = vadd.f32 %v1306, %v1307
    %v1309 = vsel %vm1295, %v1294, 0.0
    %v1310 = vadd.f32 %v1308, %v1309
    %v1311 = vrcp.pop %v1310
    %v1312 = vmul.f32 %v1280, %v1311
    %v1313 = vmul.f32 %v1282, %v1311
    %v1314 = vmul.f32 %v1284, %v1311
    %v1315 = vmul.f32 %v1286, %v1311
    %v1316 = vmul.f32 %v1288, %v1311
    %v1317 = vmul.f32 %v1290, %v1311
    %v1318 = vmul.f32 %v1292, %v1311
    %v1319 = vmul.f32 %v1294, %v1311
    %v1320 = vunpack.c.l.bf16 %v1049
    %v1321 = vunpack.c.l.bf16 %v1050
    %v1322 = vunpack.c.l.bf16 %v1051
    %v1323 = vunpack.c.l.bf16 %v1052
    %v1324 = vunpack.c.l.bf16 %v1053
    %v1325 = vunpack.c.l.bf16 %v1054
    %v1326 = vunpack.c.l.bf16 %v1055
    %v1327 = vunpack.c.l.bf16 %v1056
    %1329 = vset.pattern.permute.xlu0 0
    %1330 = vperm.xlu0 %1329, %v1312
    %v1331 = vpop.permute.xlu0 %1330
    %v1334 = vunpack.c.l.s4 269488144
    %v1335 = vunpack.c.0.s8 %v1334
    %v1336 = vlaneseq
    %v1337 = vshrl.u32 %v1336, 7
    %v1338 = vsub.s32 %v1335, %v1337
    %v1339 = vrot.slane %v1331, %v1338
    %1341 = vset.pattern.permute.xlu0 0
    %1342 = vperm.xlu0 %1341, %v1313
    %v1343 = vpop.permute.xlu0 %1342
    %v1346 = vunpack.c.l.s4 269488144
    %v1347 = vunpack.c.0.s8 %v1346
    %v1348 = vlaneseq
    %v1349 = vshrl.u32 %v1348, 7
    %v1350 = vsub.s32 %v1347, %v1349
    %v1351 = vrot.slane %v1343, %v1350
    %1353 = vset.pattern.permute.xlu0 0
    %1354 = vperm.xlu0 %1353, %v1314
    %v1355 = vpop.permute.xlu0 %1354
    %v1358 = vunpack.c.l.s4 269488144
    %v1359 = vunpack.c.0.s8 %v1358
    %v1360 = vlaneseq
    %v1361 = vshrl.u32 %v1360, 7
    %v1362 = vsub.s32 %v1359, %v1361
    %v1363 = vrot.slane %v1355, %v1362
    %1365 = vset.pattern.permute.xlu0 0
    %1366 = vperm.xlu0 %1365, %v1315
    %v1367 = vpop.permute.xlu0 %1366
    %v1370 = vunpack.c.l.s4 269488144
    %v1371 = vunpack.c.0.s8 %v1370
    %v1372 = vlaneseq
    %v1373 = vshrl.u32 %v1372, 7
    %v1374 = vsub.s32 %v1371, %v1373
    %v1375 = vrot.slane %v1367, %v1374
    %1377 = vset.pattern.permute.xlu0 0
    %1378 = vperm.xlu0 %1377, %v1316
    %v1379 = vpop.permute.xlu0 %1378
    %v1382 = vunpack.c.l.s4 269488144
    %v1383 = vunpack.c.0.s8 %v1382
    %v1384 = vlaneseq
    %v1385 = vshrl.u32 %v1384, 7
    %v1386 = vsub.s32 %v1383, %v1385
    %v1387 = vrot.slane %v1379, %v1386
    %1389 = vset.pattern.permute.xlu0 0
    %1390 = vperm.xlu0 %1389, %v1317
    %v1391 = vpop.permute.xlu0 %1390
    %v1394 = vunpack.c.l.s4 269488144
    %v1395 = vunpack.c.0.s8 %v1394
    %v1396 = vlaneseq
    %v1397 = vshrl.u32 %v1396, 7
    %v1398 = vsub.s32 %v1395, %v1397
    %v1399 = vrot.slane %v1391, %v1398
    %1401 = vset.pattern.permute.xlu0 0
    %1402 = vperm.xlu0 %1401, %v1318
    %v1403 = vpop.permute.xlu0 %1402
    %v1406 = vunpack.c.l.s4 269488144
    %v1407 = vunpack.c.0.s8 %v1406
    %v1408 = vlaneseq
    %v1409 = vshrl.u32 %v1408, 7
    %v1410 = vsub.s32 %v1407, %v1409
    %v1411 = vrot.slane %v1403, %v1410
    %1413 = vset.pattern.permute.xlu0 0
    %1414 = vperm.xlu0 %1413, %v1319
    %v1415 = vpop.permute.xlu0 %1414
    %v1418 = vunpack.c.l.s4 269488144
    %v1419 = vunpack.c.0.s8 %v1418
    %v1420 = vlaneseq
    %v1421 = vshrl.u32 %v1420, 7
    %v1422 = vsub.s32 %v1419, %v1421
    %v1423 = vrot.slane %v1415, %v1422
    %v1424 = vmul.f32 %v1339, %v1320
    %v1425 = vmul.f32 %v1351, %v1321
    %v1426 = vmul.f32 %v1363, %v1322
    %v1427 = vmul.f32 %v1375, %v1323
    %v1428 = vmul.f32 %v1387, %v1324
    %v1429 = vmul.f32 %v1399, %v1325
    %v1430 = vmul.f32 %v1411, %v1326
    %v1431 = vmul.f32 %v1423, %v1327
    %vm1432 = vcmask 254976
    %v1433 = vsel %vm1432, %v1424, 0.0
    %v1434 = vsel %vm1432, %v1425, 0.0
    %v1435 = vadd.f32 %v1433, %v1434
    %v1436 = vsel %vm1432, %v1426, 0.0
    %v1437 = vadd.f32 %v1435, %v1436
    %v1438 = vsel %vm1432, %v1427, 0.0
    %v1439 = vadd.f32 %v1437, %v1438
    %v1440 = vsel %vm1432, %v1428, 0.0
    %v1441 = vadd.f32 %v1439, %v1440
    %v1442 = vsel %vm1432, %v1429, 0.0
    %v1443 = vadd.f32 %v1441, %v1442
    %v1444 = vsel %vm1432, %v1430, 0.0
    %v1445 = vadd.f32 %v1443, %v1444
    %v1446 = vsel %vm1432, %v1431, 0.0
    %v1447 = vadd.f32 %v1445, %v1446
    %v1448 = vpack.c.bf16 %v1447, %v1447
    %v1449 = vld [vmem:[%s9] sm:$0xf]
    %v1450 = vld [vmem:[%s9 + $0x4] sm:$0xf]
    %v1451 = vld [vmem:[%s9 + $0x8] sm:$0xf]
    %v1452 = vld [vmem:[%s9 + $0xc] sm:$0xf]
    %v1453 = vld [vmem:[%s10] sm:$0x1]
    %v1455 = vlaneseq
    %v1456 = vshrl.u32 %v1455, 7
    %v1457 = vsub.s32 0, %v1456
    %v1458 = vrot.slane %v1453, %v1457
    %v1464 = vunpack.c.l.b16 %v1449
    %v1465 = vunpack.c.l.b16 %v1450
    %v1466 = vunpack.c.l.b16 %v1451
    %v1467 = vunpack.c.l.b16 %v1452
    %v1468 = vpack.c.b16 %v1465, %v1464
    %v1469 = vpack.c.b16 %v1467, %v1466
    %v1473 = vsel %vm308, %v1448, 0
    %1475 = vmatprep.subr.bf16.mxu0 0
    %1476 = vmatpush1.bf16.msra.mxu0 %v1468
    %1477 = vmatprep.subr.bf16.mxu0 0
    %1478 = vmatpush1.bf16.msra.mxu0 %v1469
    %1479 = vmatprep.subr.bf16.mxu0 0
    %1480 = vmatpush1.bf16.msra.mxu0 0
    %1481 = vmatprep.subr.bf16.mxu0 0
    %1482 = vmatpush1.bf16.msra.mxu0 0
    %1483 = vmatprep.subr.bf16.mxu0 0
    %1484 = vmatpush1.bf16.msra.mxu0 0
    %1485 = vmatprep.subr.bf16.mxu0 0
    %1486 = vmatpush1.bf16.msra.mxu0 0
    %1487 = vmatprep.subr.bf16.mxu0 0
    %1488 = vmatpush1.bf16.msra.mxu0 0
    %1489 = vmatprep.subr.bf16.mxu0 0
    %1490 = vmatpush1.bf16.msra.mxu0 0
    %1491 = vmatprep.subr.bf16.mxu0 0
    %1492 = vmatpush1.bf16.msra.mxu0 0
    %1493 = vmatprep.subr.bf16.mxu0 0
    %1494 = vmatpush1.bf16.msra.mxu0 0
    %1495 = vmatprep.subr.bf16.mxu0 0
    %1496 = vmatpush1.bf16.msra.mxu0 0
    %1497 = vmatprep.subr.bf16.mxu0 0
    %1498 = vmatpush1.bf16.msra.mxu0 0
    %1499 = vmatprep.subr.bf16.mxu0 0
    %1500 = vmatpush1.bf16.msra.mxu0 0
    %1501 = vmatprep.subr.bf16.mxu0 0
    %1502 = vmatpush1.bf16.msra.mxu0 0
    %1503 = vmatprep.subr.bf16.mxu0 0
    %1504 = vmatpush1.bf16.msra.mxu0 0
    %1505 = vmatprep.subr.bf16.mxu0 0
    %1506 = vmatpush1.bf16.msra.mxu0 0
    %1507 = vmatprep.mubr.bf16.mxu0 0
    %1508 = vmatmul.mubr.bf16.gmra.mrb[0].mxu0 %v1473
    %v1509 = vpop.f32.mrb[0].mxu0
    %v1510 = vadd.f32 %v1458, %v1509
    %v1511 = vpop.f32.mrb[0].mxu0
    %v1512 = vpop.f32.mrb[0].mxu0
    %v1513 = vpop.f32.mrb[0].mxu0
    %1514 = vdwg.mxu0
    %v1515 = vmax.f32 %v1510, 0.0
    %v1516 = vld [vmem:[%s11] sm:$0x1]
    %v1517 = vpack.c.bf16 %v1515, %v1515
    %v1518 = vld [vmem:[#allocation4] sm:$0x1]
    %1520 = vset.pattern.permute.xlu0 0
    %1521 = vperm.xlu0 %1520, %v1518
    %v1522 = vpop.permute.xlu0 %1521
    %v1524 = vlaneseq
    %v1525 = vshrl.u32 %v1524, 7
    %v1526 = vsub.s32 0, %v1525
    %v1527 = vrot.slane %v1522, %v1526
    %vm1528 = vcmask 523264
    %v1530 = vsel %vm1528, %v1516, 0
    %v1533 = vsel %vm1528, %v1517, 0
    %1535 = vmatprep.subr.bf16.mxu0 0
    %1536 = vmatpush1.bf16.xpose.msra.mxu0 %v1533
    %1537 = vmatprep.subr.bf16.mxu0 0
    %1538 = vmatpush1.bf16.xpose.msra.mxu0 0
    %1539 = vmatprep.subr.bf16.mxu0 0
    %1540 = vmatpush1.bf16.xpose.msra.mxu0 0
    %1541 = vmatprep.subr.bf16.mxu0 0
    %1542 = vmatpush1.bf16.xpose.msra.mxu0 0
    %1543 = vmatprep.subr.bf16.mxu0 0
    %1544 = vmatpush1.bf16.xpose.msra.mxu0 0
    %1545 = vmatprep.subr.bf16.mxu0 0
    %1546 = vmatpush1.bf16.xpose.msra.mxu0 0
    %1547 = vmatprep.subr.bf16.mxu0 0
    %1548 = vmatpush1.bf16.xpose.msra.mxu0 0
    %1549 = vmatprep.subr.bf16.mxu0 0
    %1550 = vmatpush1.bf16.xpose.msra.mxu0 0
    %1551 = vmatprep.subr.bf16.mxu0 0
    %1552 = vmatpush1.bf16.xpose.msra.mxu0 0
    %1553 = vmatprep.subr.bf16.mxu0 0
    %1554 = vmatpush1.bf16.xpose.msra.mxu0 0
    %1555 = vmatprep.subr.bf16.mxu0 0
    %1556 = vmatpush1.bf16.xpose.msra.mxu0 0
    %1557 = vmatprep.subr.bf16.mxu0 0
    %1558 = vmatpush1.bf16.xpose.msra.mxu0 0
    %1559 = vmatprep.subr.bf16.mxu0 0
    %1560 = vmatpush1.bf16.xpose.msra.mxu0 0
    %1561 = vmatprep.subr.bf16.mxu0 0
    %1562 = vmatpush1.bf16.xpose.msra.mxu0 0
    %1563 = vmatprep.subr.bf16.mxu0 0
    %1564 = vmatpush1.bf16.xpose.msra.mxu0 0
    %1565 = vmatprep.subr.bf16.mxu0 0
    %1566 = vmatpush1.bf16.xpose.msra.mxu0 0
    %1567 = vmatprep.mubr.bf16.mxu0 0
    %1568 = vmatmul.mubr.bf16.gmra.mrb[0].mxu0 %v1530
    %v1569 = vpop.f32.mrb[0].mxu0
    %v1570 = vadd.f32 %v1527, %v1569
    %v1571 = vpop.f32.mrb[0].mxu0
    %v1572 = vpop.f32.mrb[0].mxu0
    %v1573 = vpop.f32.mrb[0].mxu0
    %1574 = vdwg.mxu0
    %vm1575 = vcmask 8192
    %1576 = vst.msk [vmem:[#allocation5] sm:$0x1] %vm1575, %v1570
    // Predicated region
    $region54: #{improved_cnn_lstm_attention.1} parent=1 // pred_check
      _
    $region55: #{improved_cnn_lstm_attention.1} parent=1 // pred_check_branch
      %1578 = sbr.rel (0) target = $region57
    $region56: #{improved_cnn_lstm_attention.1} parent=1 // pred_region
      %s1580 = ssub.s32 16, 16
      %1581 = vsyncadd [#allocation6], %s1580
      %s1583 = sshll.u32 [#allocation5], 4
      %s1584 = int_to_ptr.vmem [resolvable:$true] %s1583
      %1586 = dma.vmem_to_hbm [thread:$0]  %s1584, 16, %s13, [#allocation6]
    $region57: #{improved_cnn_lstm_attention.1} parent=1 // pred_fallthru
      _
    // Predicated region
    $region58: #{improved_cnn_lstm_attention.1} parent=1 // pred_check
      _
    $region59: #{improved_cnn_lstm_attention.1} parent=1 // pred_check_branch
      %1588 = sbr.rel (0) target = $region61
    $region60: #{improved_cnn_lstm_attention.1} parent=1 // pred_region
      %1589 = dma.done [#allocation6], 16
    $region61: #{improved_cnn_lstm_attention.1} parent=1 // pred_fallthru
      _
    %1590 = vsyncpa [#allocation6], 1

</llo_original>
